<compile_context>
chip_gen: v7x
topology: tpu7x:2x2x1
jax: 0.10.0
libtpu: 0.0.40
codegen_flags: <defaults>
</compile_context>

<pallas_src>
import jax
import jax.numpy as jnp
from jax.experimental import pallas as pl
from jax.experimental.pallas import tpu as pltpu

EPS = 1e-5  # PyTorch BatchNorm1d default eps


def _head_kernel(x_ref, w_ref, b_ref, out_ref):
    # x_ref: [Bt, HW, C] (C lane-dense)  w_ref: [C, Np]  b_ref: [1, Np]  out_ref: [Bt, Np]
    # Sum-pool over the spatial (sublane) axis; cast fused into the reduce.
    s = jnp.sum(x_ref[...], axis=1, dtype=jnp.float32)          # [Bt, C]
    # F.relu before the classifier (1/HW folded into w_ref, relu is +-homogeneous).
    act = jnp.maximum(s, 0.0)
    # BN(eval) + Linear + 1/HW folded into one affine map (MXU).
    y = jnp.dot(act, w_ref[...], preferred_element_type=jnp.float32)
    out_ref[...] = (y + b_ref[...]).astype(out_ref.dtype)


def _round_up(v, m):
    return (v + m - 1) // m * m


def _pick_bt(B, per_row_bytes):
    """Largest batch tile that (a) double-buffers within ~28 MiB of input VMEM
    (safe under v7x's 64 MiB) and (b) gives >= 2 grid steps when B > 8 so both
    v7x TensorCores get work."""
    if B <= 8:
        return B
    bt = min(32, _round_up(pl.cdiv(B, 2), 8))
    budget = 28 << 20
    while bt > 8 and 2 * bt * per_row_bytes > budget:
        bt -= 8
    return bt


def grad_model_head(feat_nchw, gamma, beta, running_mean, running_var,
                    lin_w, lin_b):
    """feat_nchw: [B, C, H, W] backbone feature map (NCHW; f32 or bf16).
       gamma/beta/running_mean/running_var: [C] BatchNorm1d params (eval mode).
       lin_w: [num_classes, C] (PyTorch Linear layout), lin_b: [num_classes]."""
    B, C, H, W = feat_nchw.shape
    N = lin_w.shape[0]
    HW = H * W

    # One XLA transpose so the feature block is lane-dense in C (perf item 1b).
    x = jnp.transpose(feat_nchw, (0, 2, 3, 1)).reshape(B, HW, C)   # [B, HW, C]

    # Fold eval-mode BatchNorm1d AND the 1/HW avg-pool factor into the Linear.
    scale = gamma.astype(jnp.float32) * jax.lax.rsqrt(
        running_var.astype(jnp.float32) + EPS)                      # [C]
    wt = lin_w.astype(jnp.float32).T                                # [C, N]
    w_eff = wt * (scale / HW)[:, None]                              # [C, N] (1/HW folded)
    b_eff = lin_b.astype(jnp.float32) + (
        beta.astype(jnp.float32)
        - running_mean.astype(jnp.float32) * scale) @ wt            # [N]

    # Pad the class dim to 128 lanes: unmasked output stores, aligned weight tile.
    Np = _round_up(max(N, 128), 128)
    w_pad = jnp.zeros((C, Np), jnp.float32).at[:, :N].set(w_eff)
    b_pad = jnp.zeros((1, Np), jnp.float32).at[:, :N].set(b_eff)

    # Batch tiling (double-buffered feature tile sized for the dense layout).
    itemsize = jnp.dtype(x.dtype).itemsize
    sub = 8 * (4 // itemsize)                       # sublane granule (8 f32 / 16 bf16)
    per_row = _round_up(HW, sub) * _round_up(C, 128) * itemsize
    Bt = _pick_bt(B, per_row)
    grid = (pl.cdiv(B, Bt),)
    # NOTE: ragged last tile (B % Bt != 0) only feeds garbage into output rows
    # that are masked off on writeback; valid rows are unaffected.

    # Explicit scoped-VMEM budget (double-buffered) with headroom, < 64 MiB (v7x).
    in_buf = Bt * per_row
    w_buf = _round_up(C, 8) * Np * 4
    b_buf = 8 * Np * 4
    out_buf = _round_up(Bt, 8) * Np * 4
    vmem_limit = int(min(2 * (in_buf + w_buf + b_buf + out_buf) + (4 << 20),
                         60 << 20))

    # Advisory cost: this head is pure HBM traffic (feature read dominates).
    cost = pl.CostEstimate(
        flops=B * C * HW + 2 * B * C * Np,
        transcendentals=0,
        bytes_accessed=B * HW * C * itemsize + (C * Np + Np) * 4 + B * Np * 4,
    )

    out = pl.pallas_call(
        _head_kernel,
        out_shape=jax.ShapeDtypeStruct((B, Np), jnp.float32),
        grid=grid,
        in_specs=[
            pl.BlockSpec((Bt, HW, C), lambda i: (i, 0, 0)),   # batch-tiled features
            pl.BlockSpec((C, Np), lambda i: (0, 0)),          # resident folded weight
            pl.BlockSpec((1, Np), lambda i: (0, 0)),          # resident folded bias
        ],
        out_specs=pl.BlockSpec((Bt, Np), lambda i: (i, 0)),
        compiler_params=pltpu.CompilerParams(
            dimension_semantics=("parallel",),
            vmem_limit_bytes=vmem_limit,
        ),
        cost_estimate=cost,
    )(x, w_pad, b_pad)
    return out[:, :N]


def _reference(feat_nchw, gamma, beta, running_mean, running_var, lin_w, lin_b):
    # Straight transcription of GradModel.forward (post-backbone), f32, eval BN.
    pooled = jnp.mean(feat_nchw.astype(jnp.float32), axis=(2, 3))    # avgpool+flatten
    act = jnp.maximum(pooled, 0.0)                                   # F.relu
    normed = (act - running_mean) * jax.lax.rsqrt(running_var + EPS) * gamma + beta
    return normed @ lin_w.T + lin_b                                  # Linear(2048, 7)


if __name__ == "__main__":
    B, C, H, W = 2, 2048, 7, 7      # ResNet-style last-stage feature map
    NUM_CLASSES = 7

    key = jax.random.PRNGKey(0)
    k_feat, k_g, k_b, k_m, k_v, k_w, k_lb = jax.random.split(key, 7)

    feat = jax.random.normal(k_feat, (B, C, H, W), dtype=jnp.float32)

    # Deterministic synthetic parameters (BatchNorm1d(2048) + Linear(2048, 7))
    gamma = 1.0 + 0.1 * jax.random.normal(k_g, (C,), dtype=jnp.float32)
    beta = 0.1 * jax.random.normal(k_b, (C,), dtype=jnp.float32)
    running_mean = 0.05 * jax.random.normal(k_m, (C,), dtype=jnp.float32)
    running_var = 0.5 + jax.random.uniform(k_v, (C,), dtype=jnp.float32)  # > 0
    lin_w = 0.02 * jax.random.normal(k_w, (NUM_CLASSES, C), dtype=jnp.float32)
    lin_b = 0.01 * jax.random.normal(k_lb, (NUM_CLASSES,), dtype=jnp.float32)

    out = grad_model_head(feat, gamma, beta, running_mean, running_var,
                          lin_w, lin_b)
    out = jax.block_until_ready(out)

    ref = _reference(feat, gamma, beta, running_mean, running_var, lin_w, lin_b)
    assert out.shape == (B, NUM_CLASSES)
    assert jnp.allclose(out, ref, rtol=1e-4, atol=1e-4), "mismatch vs reference"

    print("KERNEL_OK")
</pallas_src>

<mosaic_0001>
module attributes {stable_mosaic.version = 11 : i64} {
  func.func @_head_kernel(%arg0: i32, %arg1: memref<2x49x2048xf32, #tpu.memory_space<vmem>>, %arg2: memref<2048x128xf32, #tpu.memory_space<vmem>>, %arg3: memref<1x128xf32, #tpu.memory_space<vmem>>, %arg4: memref<2x128xf32, #tpu.memory_space<vmem>>) attributes {dimension_semantics = [#tpu.dimension_semantics<parallel>], iteration_bounds = array<i64: 1>, scalar_prefetch = 0 : i64, scratch_operands = 0 : i64, tpu.core_type = #tpu.core_type<tc>, window_params = [{transform_indices = @transform_0, window_bounds = array<i64: 2, 49, 2048>}, {pipeline_mode = #tpu.pipeline_mode<synchronous>, transform_indices = @transform_1, window_bounds = array<i64: 2048, 128>}, {pipeline_mode = #tpu.pipeline_mode<synchronous>, transform_indices = @transform_2, window_bounds = array<i64: 1, 128>}, {transform_indices = @transform_3, window_bounds = array<i64: 2, 128>}]} {
    %c0 = arith.constant 0 : index
    %c0_0 = arith.constant 0 : index
    %c0_1 = arith.constant 0 : index
    %0 = vector.load %arg1[%c0, %c0_0, %c0_1] : memref<2x49x2048xf32, #tpu.memory_space<vmem>>, vector<2x49x2048xf32>
    %cst = arith.constant dense<0.000000e+00> : vector<2x2048xf32>
    %1 = vector.multi_reduction <add>, %0, %cst [1] : vector<2x49x2048xf32> to vector<2x2048xf32>
    %cst_2 = arith.constant 0.000000e+00 : f32
    %2 = vector.broadcast %cst_2 : f32 to vector<2x2048xf32>
    %3 = arith.maximumf %1, %2 : vector<2x2048xf32>
    %c0_3 = arith.constant 0 : index
    %c0_4 = arith.constant 0 : index
    %4 = vector.load %arg2[%c0_3, %c0_4] : memref<2048x128xf32, #tpu.memory_space<vmem>>, vector<2048x128xf32>
    %cst_5 = arith.constant dense<0.000000e+00> : vector<2x128xf32>
    %5 = tpu.matmul %3, %4, %cst_5 {dimension_numbers = #tpu.dot_dimension_numbers<[1], [0], [0], [1], [0, 0, 1, 1], [], []>} : vector<2x2048xf32>, vector<2048x128xf32>, vector<2x128xf32> -> vector<2x128xf32>
    %c0_6 = arith.constant 0 : index
    %c0_7 = arith.constant 0 : index
    %6 = vector.load %arg3[%c0_6, %c0_7] : memref<1x128xf32, #tpu.memory_space<vmem>>, vector<1x128xf32>
    %7 = vector.broadcast %6 : vector<1x128xf32> to vector<2x128xf32>
    %8 = arith.addf %5, %7 : vector<2x128xf32>
    %c0_8 = arith.constant 0 : index
    %c0_9 = arith.constant 0 : index
    %9 = vector.load %arg4[%c0_8, %c0_9] : memref<2x128xf32, #tpu.memory_space<vmem>>, vector<2x128xf32>
    tpu.vector_store %arg4[%c0_8, %c0_9], %8 {strides = array<i32>} : memref<2x128xf32, #tpu.memory_space<vmem>>, vector<2x128xf32>,
    return
  }
  func.func @transform_0(%arg0: i32) -> (i32, i32, i32) {
    %c0_i32 = arith.constant 0 : i32
    %c0_i32_0 = arith.constant 0 : i32
    %c0_i32_1 = arith.constant 0 : i32
    return %arg0, %c0_i32, %c0_i32_0 : i32, i32, i32
  }
  func.func @transform_1(%arg0: i32) -> (i32, i32) {
    %c0_i32 = arith.constant 0 : i32
    %c0_i32_0 = arith.constant 0 : i32
    %c0_i32_1 = arith.constant 0 : i32
    return %c0_i32, %c0_i32_0 : i32, i32
  }
  func.func @transform_2(%arg0: i32) -> (i32, i32) {
    %c0_i32 = arith.constant 0 : i32
    %c0_i32_0 = arith.constant 0 : i32
    %c0_i32_1 = arith.constant 0 : i32
    return %c0_i32, %c0_i32_0 : i32, i32
  }
  func.func @transform_3(%arg0: i32) -> (i32, i32) {
    %c0_i32 = arith.constant 0 : i32
    %c0_i32_0 = arith.constant 0 : i32
    return %arg0, %c0_i32 : i32, i32
  }
}

</mosaic_0001>

<llo_original>
// kernel: tpu_custom_call.1
$region0: #{tpu_custom_call.1}
  #allocation0 [shape = 'u32[]', space=smem, size = 0x4, offset = 0x4, fixed_abs, tag = 'smem constant byte address 0x4 - core index']
  #allocation1 [shape = 'u32[144,128]{1,0:T(1,128)}', space=vmem, size = 0x12000, scoped, tag = 'internal scratch']
  %s0 = inlined_call_operand.vmem [shape: f32[2,49,2048], index: 0, kind: input, shape index: {}]
  %s1 = inlined_call_operand.vmem [shape: f32[2048,128], index: 1, kind: input, shape index: {}]
  %s2 = inlined_call_operand.vmem [shape: f32[1,128], index: 2, kind: input, shape index: {}]
  %s3 = inlined_call_operand.hbm [shape: f32[2,128], index: 3, kind: output, shape index: {}]
  %s4 = sld [smem:[#allocation0]]
  $region22: #{tpu_custom_call.1} parent=0
    _
  %s6 = ssub.s32 1, %s4
  %s7 = scalar_select 0, %s6, %s4
  $region1: #{tpu_custom_call.1} parent=0
    #allocation2 [shape = 'u8[1024]{0}', space=vmem, size = 0x400, scoped, tag = 'output window, operand 0, single buffered']
    #allocation3 [shape = 's32[1]{0}', space=sflag, size = 0x4, scoped, tag = 'scoped memory for tpu_custom_call.1']
    %8 = vsyncpa [#allocation3], 0
    // Predicated region
    $region2: #{tpu_custom_call.1} parent=1 // pred_check
      _
    $region3: #{tpu_custom_call.1} parent=1 // pred_check_branch
      %10 = sbr.rel (0) target = $region5
    $region4: #{tpu_custom_call.1} parent=1 // pred_region
      _
    $region5: #{tpu_custom_call.1} parent=1 // pred_fallthru
      _
    // Predicated region
    $region6: #{tpu_custom_call.1} parent=1 // pred_check
      _
    $region7: #{tpu_custom_call.1} parent=1 // pred_check_branch
      %12 = sbr.rel (0) target = $region9
    $region8: #{tpu_custom_call.1} parent=1 // pred_region
      _
    $region9: #{tpu_custom_call.1} parent=1 // pred_fallthru
      _
    // Predicated region
    $region10: #{tpu_custom_call.1} parent=1 // pred_check
      _
    $region11: #{tpu_custom_call.1} parent=1 // pred_check_branch
      %14 = sbr.rel (0) target = $region13
    $region12: #{tpu_custom_call.1} parent=1 // pred_region
      _
    $region13: #{tpu_custom_call.1} parent=1 // pred_fallthru
      _
    %v15 = vld [vmem:[%s0] sm:$0xff]
    %v16 = vld [vmem:[%s0 + $0x8] sm:$0xff]
    %v17 = vld [vmem:[%s0 + $0x10] sm:$0xff]
    %v18 = vld [vmem:[%s0 + $0x18] sm:$0xff]
    %v19 = vld [vmem:[%s0 + $0x20] sm:$0xff]
    %v20 = vld [vmem:[%s0 + $0x28] sm:$0xff]
    %v21 = vld [vmem:[%s0 + $0x30] sm:$0xff]
    %v22 = vld [vmem:[%s0 + $0x38] sm:$0xff]
    %v23 = vld [vmem:[%s0 + $0x40] sm:$0xff]
    %v24 = vld [vmem:[%s0 + $0x48] sm:$0xff]
    %v25 = vld [vmem:[%s0 + $0x50] sm:$0xff]
    %v26 = vld [vmem:[%s0 + $0x58] sm:$0xff]
    %v27 = vld [vmem:[%s0 + $0x60] sm:$0xff]
    %v28 = vld [vmem:[%s0 + $0x68] sm:$0xff]
    %v29 = vld [vmem:[%s0 + $0x70] sm:$0xff]
    %v30 = vld [vmem:[%s0 + $0x78] sm:$0xff]
    %v31 = vld [vmem:[%s0 + $0x80] sm:$0xff]
    %v32 = vld [vmem:[%s0 + $0x88] sm:$0xff]
    %v33 = vld [vmem:[%s0 + $0x90] sm:$0xff]
    %v34 = vld [vmem:[%s0 + $0x98] sm:$0xff]
    %v35 = vld [vmem:[%s0 + $0xa0] sm:$0xff]
    %v36 = vld [vmem:[%s0 + $0xa8] sm:$0xff]
    %v37 = vld [vmem:[%s0 + $0xb0] sm:$0xff]
    %v38 = vld [vmem:[%s0 + $0xb8] sm:$0xff]
    %v39 = vld [vmem:[%s0 + $0xc0] sm:$0xff]
    %v40 = vld [vmem:[%s0 + $0xc8] sm:$0xff]
    %v41 = vld [vmem:[%s0 + $0xd0] sm:$0xff]
    %v42 = vld [vmem:[%s0 + $0xd8] sm:$0xff]
    %v43 = vld [vmem:[%s0 + $0xe0] sm:$0xff]
    %v44 = vld [vmem:[%s0 + $0xe8] sm:$0xff]
    %v45 = vld [vmem:[%s0 + $0xf0] sm:$0xff]
    %v46 = vld [vmem:[%s0 + $0xf8] sm:$0xff]
    %v47 = vld [vmem:[%s0 + $0x100] sm:$0xff]
    %v48 = vld [vmem:[%s0 + $0x108] sm:$0xff]
    %v49 = vld [vmem:[%s0 + $0x110] sm:$0xff]
    %v50 = vld [vmem:[%s0 + $0x118] sm:$0xff]
    %v51 = vld [vmem:[%s0 + $0x120] sm:$0xff]
    %v52 = vld [vmem:[%s0 + $0x128] sm:$0xff]
    %v53 = vld [vmem:[%s0 + $0x130] sm:$0xff]
    %v54 = vld [vmem:[%s0 + $0x138] sm:$0xff]
    %v55 = vld [vmem:[%s0 + $0x140] sm:$0xff]
    %v56 = vld [vmem:[%s0 + $0x148] sm:$0xff]
    %v57 = vld [vmem:[%s0 + $0x150] sm:$0xff]
    %v58 = vld [vmem:[%s0 + $0x158] sm:$0xff]
    %v59 = vld [vmem:[%s0 + $0x160] sm:$0xff]
    %v60 = vld [vmem:[%s0 + $0x168] sm:$0xff]
    %v61 = vld [vmem:[%s0 + $0x170] sm:$0xff]
    %v62 = vld [vmem:[%s0 + $0x178] sm:$0xff]
    %v63 = vld [vmem:[%s0 + $0x180] sm:$0xff]
    %v64 = vld [vmem:[%s0 + $0x188] sm:$0xff]
    %v65 = vld [vmem:[%s0 + $0x190] sm:$0xff]
    %v66 = vld [vmem:[%s0 + $0x198] sm:$0xff]
    %v67 = vld [vmem:[%s0 + $0x1a0] sm:$0xff]
    %v68 = vld [vmem:[%s0 + $0x1a8] sm:$0xff]
    %v69 = vld [vmem:[%s0 + $0x1b0] sm:$0xff]
    %v70 = vld [vmem:[%s0 + $0x1b8] sm:$0xff]
    %v71 = vld [vmem:[%s0 + $0x1c0] sm:$0xff]
    %v72 = vld [vmem:[%s0 + $0x1c8] sm:$0xff]
    %v73 = vld [vmem:[%s0 + $0x1d0] sm:$0xff]
    %v74 = vld [vmem:[%s0 + $0x1d8] sm:$0xff]
    %v75 = vld [vmem:[%s0 + $0x1e0] sm:$0xff]
    %v76 = vld [vmem:[%s0 + $0x1e8] sm:$0xff]
    %v77 = vld [vmem:[%s0 + $0x1f0] sm:$0xff]
    %v78 = vld [vmem:[%s0 + $0x1f8] sm:$0xff]
    %v79 = vld [vmem:[%s0 + $0x200] sm:$0xff]
    %v80 = vld [vmem:[%s0 + $0x208] sm:$0xff]
    %v81 = vld [vmem:[%s0 + $0x210] sm:$0xff]
    %v82 = vld [vmem:[%s0 + $0x218] sm:$0xff]
    %v83 = vld [vmem:[%s0 + $0x220] sm:$0xff]
    %v84 = vld [vmem:[%s0 + $0x228] sm:$0xff]
    %v85 = vld [vmem:[%s0 + $0x230] sm:$0xff]
    %v86 = vld [vmem:[%s0 + $0x238] sm:$0xff]
    %v87 = vld [vmem:[%s0 + $0x240] sm:$0xff]
    %v88 = vld [vmem:[%s0 + $0x248] sm:$0xff]
    %v89 = vld [vmem:[%s0 + $0x250] sm:$0xff]
    %v90 = vld [vmem:[%s0 + $0x258] sm:$0xff]
    %v91 = vld [vmem:[%s0 + $0x260] sm:$0xff]
    %v92 = vld [vmem:[%s0 + $0x268] sm:$0xff]
    %v93 = vld [vmem:[%s0 + $0x270] sm:$0xff]
    %v94 = vld [vmem:[%s0 + $0x278] sm:$0xff]
    %v95 = vld [vmem:[%s0 + $0x280] sm:$0xff]
    %v96 = vld [vmem:[%s0 + $0x288] sm:$0xff]
    %v97 = vld [vmem:[%s0 + $0x290] sm:$0xff]
    %v98 = vld [vmem:[%s0 + $0x298] sm:$0xff]
    %v99 = vld [vmem:[%s0 + $0x2a0] sm:$0xff]
    %v100 = vld [vmem:[%s0 + $0x2a8] sm:$0xff]
    %v101 = vld [vmem:[%s0 + $0x2b0] sm:$0xff]
    %v102 = vld [vmem:[%s0 + $0x2b8] sm:$0xff]
    %v103 = vld [vmem:[%s0 + $0x2c0] sm:$0xff]
    %v104 = vld [vmem:[%s0 + $0x2c8] sm:$0xff]
    %v105 = vld [vmem:[%s0 + $0x2d0] sm:$0xff]
    %v106 = vld [vmem:[%s0 + $0x2d8] sm:$0xff]
    %v107 = vld [vmem:[%s0 + $0x2e0] sm:$0xff]
    %v108 = vld [vmem:[%s0 + $0x2e8] sm:$0xff]
    %v109 = vld [vmem:[%s0 + $0x2f0] sm:$0xff]
    %v110 = vld [vmem:[%s0 + $0x2f8] sm:$0xff]
    %v111 = vld [vmem:[%s0 + $0x300] sm:$0x1]
    %v112 = vld [vmem:[%s0 + $0x308] sm:$0x1]
    %v113 = vld [vmem:[%s0 + $0x310] sm:$0x1]
    %v114 = vld [vmem:[%s0 + $0x318] sm:$0x1]
    %v115 = vld [vmem:[%s0 + $0x320] sm:$0x1]
    %v116 = vld [vmem:[%s0 + $0x328] sm:$0x1]
    %v117 = vld [vmem:[%s0 + $0x330] sm:$0x1]
    %v118 = vld [vmem:[%s0 + $0x338] sm:$0x1]
    %v119 = vld [vmem:[%s0 + $0x340] sm:$0x1]
    %v120 = vld [vmem:[%s0 + $0x348] sm:$0x1]
    %v121 = vld [vmem:[%s0 + $0x350] sm:$0x1]
    %v122 = vld [vmem:[%s0 + $0x358] sm:$0x1]
    %v123 = vld [vmem:[%s0 + $0x360] sm:$0x1]
    %v124 = vld [vmem:[%s0 + $0x368] sm:$0x1]
    %v125 = vld [vmem:[%s0 + $0x370] sm:$0x1]
    %v126 = vld [vmem:[%s0 + $0x378] sm:$0x1]
    %v127 = vld [vmem:[%s0 + $0x380] sm:$0xff]
    %v128 = vld [vmem:[%s0 + $0x388] sm:$0xff]
    %v129 = vld [vmem:[%s0 + $0x390] sm:$0xff]
    %v130 = vld [vmem:[%s0 + $0x398] sm:$0xff]
    %v131 = vld [vmem:[%s0 + $0x3a0] sm:$0xff]
    %v132 = vld [vmem:[%s0 + $0x3a8] sm:$0xff]
    %v133 = vld [vmem:[%s0 + $0x3b0] sm:$0xff]
    %v134 = vld [vmem:[%s0 + $0x3b8] sm:$0xff]
    %v135 = vld [vmem:[%s0 + $0x3c0] sm:$0xff]
    %v136 = vld [vmem:[%s0 + $0x3c8] sm:$0xff]
    %v137 = vld [vmem:[%s0 + $0x3d0] sm:$0xff]
    %v138 = vld [vmem:[%s0 + $0x3d8] sm:$0xff]
    %v139 = vld [vmem:[%s0 + $0x3e0] sm:$0xff]
    %v140 = vld [vmem:[%s0 + $0x3e8] sm:$0xff]
    %v141 = vld [vmem:[%s0 + $0x3f0] sm:$0xff]
    %v142 = vld [vmem:[%s0 + $0x3f8] sm:$0xff]
    %v143 = vld [vmem:[%s0 + $0x400] sm:$0xff]
    %v144 = vld [vmem:[%s0 + $0x408] sm:$0xff]
    %v145 = vld [vmem:[%s0 + $0x410] sm:$0xff]
    %v146 = vld [vmem:[%s0 + $0x418] sm:$0xff]
    %v147 = vld [vmem:[%s0 + $0x420] sm:$0xff]
    %v148 = vld [vmem:[%s0 + $0x428] sm:$0xff]
    %v149 = vld [vmem:[%s0 + $0x430] sm:$0xff]
    %v150 = vld [vmem:[%s0 + $0x438] sm:$0xff]
    %v151 = vld [vmem:[%s0 + $0x440] sm:$0xff]
    %v152 = vld [vmem:[%s0 + $0x448] sm:$0xff]
    %v153 = vld [vmem:[%s0 + $0x450] sm:$0xff]
    %v154 = vld [vmem:[%s0 + $0x458] sm:$0xff]
    %v155 = vld [vmem:[%s0 + $0x460] sm:$0xff]
    %v156 = vld [vmem:[%s0 + $0x468] sm:$0xff]
    %v157 = vld [vmem:[%s0 + $0x470] sm:$0xff]
    %v158 = vld [vmem:[%s0 + $0x478] sm:$0xff]
    %v159 = vld [vmem:[%s0 + $0x480] sm:$0xff]
    %v160 = vld [vmem:[%s0 + $0x488] sm:$0xff]
    %v161 = vld [vmem:[%s0 + $0x490] sm:$0xff]
    %v162 = vld [vmem:[%s0 + $0x498] sm:$0xff]
    %v163 = vld [vmem:[%s0 + $0x4a0] sm:$0xff]
    %v164 = vld [vmem:[%s0 + $0x4a8] sm:$0xff]
    %v165 = vld [vmem:[%s0 + $0x4b0] sm:$0xff]
    %v166 = vld [vmem:[%s0 + $0x4b8] sm:$0xff]
    %v167 = vld [vmem:[%s0 + $0x4c0] sm:$0xff]
    %v168 = vld [vmem:[%s0 + $0x4c8] sm:$0xff]
    %v169 = vld [vmem:[%s0 + $0x4d0] sm:$0xff]
    %v170 = vld [vmem:[%s0 + $0x4d8] sm:$0xff]
    %v171 = vld [vmem:[%s0 + $0x4e0] sm:$0xff]
    %v172 = vld [vmem:[%s0 + $0x4e8] sm:$0xff]
    %v173 = vld [vmem:[%s0 + $0x4f0] sm:$0xff]
    %v174 = vld [vmem:[%s0 + $0x4f8] sm:$0xff]
    %v175 = vld [vmem:[%s0 + $0x500] sm:$0xff]
    %v176 = vld [vmem:[%s0 + $0x508] sm:$0xff]
    %v177 = vld [vmem:[%s0 + $0x510] sm:$0xff]
    %v178 = vld [vmem:[%s0 + $0x518] sm:$0xff]
    %v179 = vld [vmem:[%s0 + $0x520] sm:$0xff]
    %v180 = vld [vmem:[%s0 + $0x528] sm:$0xff]
    %v181 = vld [vmem:[%s0 + $0x530] sm:$0xff]
    %v182 = vld [vmem:[%s0 + $0x538] sm:$0xff]
    %v183 = vld [vmem:[%s0 + $0x540] sm:$0xff]
    %v184 = vld [vmem:[%s0 + $0x548] sm:$0xff]
    %v185 = vld [vmem:[%s0 + $0x550] sm:$0xff]
    %v186 = vld [vmem:[%s0 + $0x558] sm:$0xff]
    %v187 = vld [vmem:[%s0 + $0x560] sm:$0xff]
    %v188 = vld [vmem:[%s0 + $0x568] sm:$0xff]
    %v189 = vld [vmem:[%s0 + $0x570] sm:$0xff]
    %v190 = vld [vmem:[%s0 + $0x578] sm:$0xff]
    %v191 = vld [vmem:[%s0 + $0x580] sm:$0xff]
    %v192 = vld [vmem:[%s0 + $0x588] sm:$0xff]
    %v193 = vld [vmem:[%s0 + $0x590] sm:$0xff]
    %v194 = vld [vmem:[%s0 + $0x598] sm:$0xff]
    %v195 = vld [vmem:[%s0 + $0x5a0] sm:$0xff]
    %v196 = vld [vmem:[%s0 + $0x5a8] sm:$0xff]
    %v197 = vld [vmem:[%s0 + $0x5b0] sm:$0xff]
    %v198 = vld [vmem:[%s0 + $0x5b8] sm:$0xff]
    %v199 = vld [vmem:[%s0 + $0x5c0] sm:$0xff]
    %v200 = vld [vmem:[%s0 + $0x5c8] sm:$0xff]
    %v201 = vld [vmem:[%s0 + $0x5d0] sm:$0xff]
    %v202 = vld [vmem:[%s0 + $0x5d8] sm:$0xff]
    %v203 = vld [vmem:[%s0 + $0x5e0] sm:$0xff]
    %v204 = vld [vmem:[%s0 + $0x5e8] sm:$0xff]
    %v205 = vld [vmem:[%s0 + $0x5f0] sm:$0xff]
    %v206 = vld [vmem:[%s0 + $0x5f8] sm:$0xff]
    %v207 = vld [vmem:[%s0 + $0x600] sm:$0xff]
    %v208 = vld [vmem:[%s0 + $0x608] sm:$0xff]
    %v209 = vld [vmem:[%s0 + $0x610] sm:$0xff]
    %v210 = vld [vmem:[%s0 + $0x618] sm:$0xff]
    %v211 = vld [vmem:[%s0 + $0x620] sm:$0xff]
    %v212 = vld [vmem:[%s0 + $0x628] sm:$0xff]
    %v213 = vld [vmem:[%s0 + $0x630] sm:$0xff]
    %v214 = vld [vmem:[%s0 + $0x638] sm:$0xff]
    %v215 = vld [vmem:[%s0 + $0x640] sm:$0xff]
    %v216 = vld [vmem:[%s0 + $0x648] sm:$0xff]
    %v217 = vld [vmem:[%s0 + $0x650] sm:$0xff]
    %v218 = vld [vmem:[%s0 + $0x658] sm:$0xff]
    %v219 = vld [vmem:[%s0 + $0x660] sm:$0xff]
    %v220 = vld [vmem:[%s0 + $0x668] sm:$0xff]
    %v221 = vld [vmem:[%s0 + $0x670] sm:$0xff]
    %v222 = vld [vmem:[%s0 + $0x678] sm:$0xff]
    %v223 = vld [vmem:[%s0 + $0x680] sm:$0x1]
    %v224 = vld [vmem:[%s0 + $0x688] sm:$0x1]
    %v225 = vld [vmem:[%s0 + $0x690] sm:$0x1]
    %v226 = vld [vmem:[%s0 + $0x698] sm:$0x1]
    %v227 = vld [vmem:[%s0 + $0x6a0] sm:$0x1]
    %v228 = vld [vmem:[%s0 + $0x6a8] sm:$0x1]
    %v229 = vld [vmem:[%s0 + $0x6b0] sm:$0x1]
    %v230 = vld [vmem:[%s0 + $0x6b8] sm:$0x1]
    %v231 = vld [vmem:[%s0 + $0x6c0] sm:$0x1]
    %v232 = vld [vmem:[%s0 + $0x6c8] sm:$0x1]
    %v233 = vld [vmem:[%s0 + $0x6d0] sm:$0x1]
    %v234 = vld [vmem:[%s0 + $0x6d8] sm:$0x1]
    %v235 = vld [vmem:[%s0 + $0x6e0] sm:$0x1]
    %v236 = vld [vmem:[%s0 + $0x6e8] sm:$0x1]
    %v237 = vld [vmem:[%s0 + $0x6f0] sm:$0x1]
    %v238 = vld [vmem:[%s0 + $0x6f8] sm:$0x1]
    %v239 = vadd.f32 %v15, %v31
    %v240 = vadd.f32 %v239, %v47
    %v241 = vadd.f32 %v240, %v63
    %v242 = vadd.f32 %v241, %v79
    %v243 = vadd.f32 %v242, %v95
    %vm244 = vcmask 1040384
    %v245 = vsel %vm244, %v111, 0.0
    %v246 = vadd.f32 %v243, %v245
    %v247 = vrot.slane %v246, 4
    %v248 = vadd.f32 %v246, %v247
    %v249 = vrot.slane %v248, 2
    %v250 = vadd.f32 %v248, %v249
    %v251 = vrot.slane %v250, 1
    %v252 = vadd.f32 %v250, %v251
    %v253 = vadd.f32 %v16, %v32
    %v254 = vadd.f32 %v253, %v48
    %v255 = vadd.f32 %v254, %v64
    %v256 = vadd.f32 %v255, %v80
    %v257 = vadd.f32 %v256, %v96
    %v258 = vsel %vm244, %v112, 0.0
    %v259 = vadd.f32 %v257, %v258
    %v260 = vrot.slane %v259, 4
    %v261 = vadd.f32 %v259, %v260
    %v262 = vrot.slane %v261, 2
    %v263 = vadd.f32 %v261, %v262
    %v264 = vrot.slane %v263, 1
    %v265 = vadd.f32 %v263, %v264
    %v266 = vadd.f32 %v17, %v33
    %v267 = vadd.f32 %v266, %v49
    %v268 = vadd.f32 %v267, %v65
    %v269 = vadd.f32 %v268, %v81
    %v270 = vadd.f32 %v269, %v97
    %v271 = vsel %vm244, %v113, 0.0
    %v272 = vadd.f32 %v270, %v271
    %v273 = vrot.slane %v272, 4
    %v274 = vadd.f32 %v272, %v273
    %v275 = vrot.slane %v274, 2
    %v276 = vadd.f32 %v274, %v275
    %v277 = vrot.slane %v276, 1
    %v278 = vadd.f32 %v276, %v277
    %v279 = vadd.f32 %v18, %v34
    %v280 = vadd.f32 %v279, %v50
    %v281 = vadd.f32 %v280, %v66
    %v282 = vadd.f32 %v281, %v82
    %v283 = vadd.f32 %v282, %v98
    %v284 = vsel %vm244, %v114, 0.0
    %v285 = vadd.f32 %v283, %v284
    %v286 = vrot.slane %v285, 4
    %v287 = vadd.f32 %v285, %v286
    %v288 = vrot.slane %v287, 2
    %v289 = vadd.f32 %v287, %v288
    %v290 = vrot.slane %v289, 1
    %v291 = vadd.f32 %v289, %v290
    %v292 = vadd.f32 %v19, %v35
    %v293 = vadd.f32 %v292, %v51
    %v294 = vadd.f32 %v293, %v67
    %v295 = vadd.f32 %v294, %v83
    %v296 = vadd.f32 %v295, %v99
    %v297 = vsel %vm244, %v115, 0.0
    %v298 = vadd.f32 %v296, %v297
    %v299 = vrot.slane %v298, 4
    %v300 = vadd.f32 %v298, %v299
    %v301 = vrot.slane %v300, 2
    %v302 = vadd.f32 %v300, %v301
    %v303 = vrot.slane %v302, 1
    %v304 = vadd.f32 %v302, %v303
    %v305 = vadd.f32 %v20, %v36
    %v306 = vadd.f32 %v305, %v52
    %v307 = vadd.f32 %v306, %v68
    %v308 = vadd.f32 %v307, %v84
    %v309 = vadd.f32 %v308, %v100
    %v310 = vsel %vm244, %v116, 0.0
    %v311 = vadd.f32 %v309, %v310
    %v312 = vrot.slane %v311, 4
    %v313 = vadd.f32 %v311, %v312
    %v314 = vrot.slane %v313, 2
    %v315 = vadd.f32 %v313, %v314
    %v316 = vrot.slane %v315, 1
    %v317 = vadd.f32 %v315, %v316
    %v318 = vadd.f32 %v21, %v37
    %v319 = vadd.f32 %v318, %v53
    %v320 = vadd.f32 %v319, %v69
    %v321 = vadd.f32 %v320, %v85
    %v322 = vadd.f32 %v321, %v101
    %v323 = vsel %vm244, %v117, 0.0
    %v324 = vadd.f32 %v322, %v323
    %v325 = vrot.slane %v324, 4
    %v326 = vadd.f32 %v324, %v325
    %v327 = vrot.slane %v326, 2
    %v328 = vadd.f32 %v326, %v327
    %v329 = vrot.slane %v328, 1
    %v330 = vadd.f32 %v328, %v329
    %v331 = vadd.f32 %v22, %v38
    %v332 = vadd.f32 %v331, %v54
    %v333 = vadd.f32 %v332, %v70
    %v334 = vadd.f32 %v333, %v86
    %v335 = vadd.f32 %v334, %v102
    %v336 = vsel %vm244, %v118, 0.0
    %v337 = vadd.f32 %v335, %v336
    %v338 = vrot.slane %v337, 4
    %v339 = vadd.f32 %v337, %v338
    %v340 = vrot.slane %v339, 2
    %v341 = vadd.f32 %v339, %v340
    %v342 = vrot.slane %v341, 1
    %v343 = vadd.f32 %v341, %v342
    %v344 = vadd.f32 %v23, %v39
    %v345 = vadd.f32 %v344, %v55
    %v346 = vadd.f32 %v345, %v71
    %v347 = vadd.f32 %v346, %v87
    %v348 = vadd.f32 %v347, %v103
    %v349 = vsel %vm244, %v119, 0.0
    %v350 = vadd.f32 %v348, %v349
    %v351 = vrot.slane %v350, 4
    %v352 = vadd.f32 %v350, %v351
    %v353 = vrot.slane %v352, 2
    %v354 = vadd.f32 %v352, %v353
    %v355 = vrot.slane %v354, 1
    %v356 = vadd.f32 %v354, %v355
    %v357 = vadd.f32 %v24, %v40
    %v358 = vadd.f32 %v357, %v56
    %v359 = vadd.f32 %v358, %v72
    %v360 = vadd.f32 %v359, %v88
    %v361 = vadd.f32 %v360, %v104
    %v362 = vsel %vm244, %v120, 0.0
    %v363 = vadd.f32 %v361, %v362
    %v364 = vrot.slane %v363, 4
    %v365 = vadd.f32 %v363, %v364
    %v366 = vrot.slane %v365, 2
    %v367 = vadd.f32 %v365, %v366
    %v368 = vrot.slane %v367, 1
    %v369 = vadd.f32 %v367, %v368
    %v370 = vadd.f32 %v25, %v41
    %v371 = vadd.f32 %v370, %v57
    %v372 = vadd.f32 %v371, %v73
    %v373 = vadd.f32 %v372, %v89
    %v374 = vadd.f32 %v373, %v105
    %v375 = vsel %vm244, %v121, 0.0
    %v376 = vadd.f32 %v374, %v375
    %v377 = vrot.slane %v376, 4
    %v378 = vadd.f32 %v376, %v377
    %v379 = vrot.slane %v378, 2
    %v380 = vadd.f32 %v378, %v379
    %v381 = vrot.slane %v380, 1
    %v382 = vadd.f32 %v380, %v381
    %v383 = vadd.f32 %v26, %v42
    %v384 = vadd.f32 %v383, %v58
    %v385 = vadd.f32 %v384, %v74
    %v386 = vadd.f32 %v385, %v90
    %v387 = vadd.f32 %v386, %v106
    %v388 = vsel %vm244, %v122, 0.0
    %v389 = vadd.f32 %v387, %v388
    %v390 = vrot.slane %v389, 4
    %v391 = vadd.f32 %v389, %v390
    %v392 = vrot.slane %v391, 2
    %v393 = vadd.f32 %v391, %v392
    %v394 = vrot.slane %v393, 1
    %v395 = vadd.f32 %v393, %v394
    %v396 = vadd.f32 %v27, %v43
    %v397 = vadd.f32 %v396, %v59
    %v398 = vadd.f32 %v397, %v75
    %v399 = vadd.f32 %v398, %v91
    %v400 = vadd.f32 %v399, %v107
    %v401 = vsel %vm244, %v123, 0.0
    %v402 = vadd.f32 %v400, %v401
    %v403 = vrot.slane %v402, 4
    %v404 = vadd.f32 %v402, %v403
    %v405 = vrot.slane %v404, 2
    %v406 = vadd.f32 %v404, %v405
    %v407 = vrot.slane %v406, 1
    %v408 = vadd.f32 %v406, %v407
    %v409 = vadd.f32 %v28, %v44
    %v410 = vadd.f32 %v409, %v60
    %v411 = vadd.f32 %v410, %v76
    %v412 = vadd.f32 %v411, %v92
    %v413 = vadd.f32 %v412, %v108
    %v414 = vsel %vm244, %v124, 0.0
    %v415 = vadd.f32 %v413, %v414
    %v416 = vrot.slane %v415, 4
    %v417 = vadd.f32 %v415, %v416
    %v418 = vrot.slane %v417, 2
    %v419 = vadd.f32 %v417, %v418
    %v420 = vrot.slane %v419, 1
    %v421 = vadd.f32 %v419, %v420
    %v422 = vadd.f32 %v29, %v45
    %v423 = vadd.f32 %v422, %v61
    %v424 = vadd.f32 %v423, %v77
    %v425 = vadd.f32 %v424, %v93
    %v426 = vadd.f32 %v425, %v109
    %v427 = vsel %vm244, %v125, 0.0
    %v428 = vadd.f32 %v426, %v427
    %v429 = vrot.slane %v428, 4
    %v430 = vadd.f32 %v428, %v429
    %v431 = vrot.slane %v430, 2
    %v432 = vadd.f32 %v430, %v431
    %v433 = vrot.slane %v432, 1
    %v434 = vadd.f32 %v432, %v433
    %v435 = vadd.f32 %v30, %v46
    %v436 = vadd.f32 %v435, %v62
    %v437 = vadd.f32 %v436, %v78
    %v438 = vadd.f32 %v437, %v94
    %v439 = vadd.f32 %v438, %v110
    %v440 = vsel %vm244, %v126, 0.0
    %v441 = vadd.f32 %v439, %v440
    %v442 = vrot.slane %v441, 4
    %v443 = vadd.f32 %v441, %v442
    %v444 = vrot.slane %v443, 2
    %v445 = vadd.f32 %v443, %v444
    %v446 = vrot.slane %v445, 1
    %v447 = vadd.f32 %v445, %v446
    %v448 = vadd.f32 %v127, %v143
    %v449 = vadd.f32 %v448, %v159
    %v450 = vadd.f32 %v449, %v175
    %v451 = vadd.f32 %v450, %v191
    %v452 = vadd.f32 %v451, %v207
    %v453 = vsel %vm244, %v223, 0.0
    %v454 = vadd.f32 %v452, %v453
    %v455 = vrot.slane %v454, 4
    %v456 = vadd.f32 %v454, %v455
    %v457 = vrot.slane %v456, 2
    %v458 = vadd.f32 %v456, %v457
    %v459 = vrot.slane %v458, 1
    %v460 = vadd.f32 %v458, %v459
    %v461 = vadd.f32 %v128, %v144
    %v462 = vadd.f32 %v461, %v160
    %v463 = vadd.f32 %v462, %v176
    %v464 = vadd.f32 %v463, %v192
    %v465 = vadd.f32 %v464, %v208
    %v466 = vsel %vm244, %v224, 0.0
    %v467 = vadd.f32 %v465, %v466
    %v468 = vrot.slane %v467, 4
    %v469 = vadd.f32 %v467, %v468
    %v470 = vrot.slane %v469, 2
    %v471 = vadd.f32 %v469, %v470
    %v472 = vrot.slane %v471, 1
    %v473 = vadd.f32 %v471, %v472
    %v474 = vadd.f32 %v129, %v145
    %v475 = vadd.f32 %v474, %v161
    %v476 = vadd.f32 %v475, %v177
    %v477 = vadd.f32 %v476, %v193
    %v478 = vadd.f32 %v477, %v209
    %v479 = vsel %vm244, %v225, 0.0
    %v480 = vadd.f32 %v478, %v479
    %v481 = vrot.slane %v480, 4
    %v482 = vadd.f32 %v480, %v481
    %v483 = vrot.slane %v482, 2
    %v484 = vadd.f32 %v482, %v483
    %v485 = vrot.slane %v484, 1
    %v486 = vadd.f32 %v484, %v485
    %v487 = vadd.f32 %v130, %v146
    %v488 = vadd.f32 %v487, %v162
    %v489 = vadd.f32 %v488, %v178
    %v490 = vadd.f32 %v489, %v194
    %v491 = vadd.f32 %v490, %v210
    %v492 = vsel %vm244, %v226, 0.0
    %v493 = vadd.f32 %v491, %v492
    %v494 = vrot.slane %v493, 4
    %v495 = vadd.f32 %v493, %v494
    %v496 = vrot.slane %v495, 2
    %v497 = vadd.f32 %v495, %v496
    %v498 = vrot.slane %v497, 1
    %v499 = vadd.f32 %v497, %v498
    %v500 = vadd.f32 %v131, %v147
    %v501 = vadd.f32 %v500, %v163
    %v502 = vadd.f32 %v501, %v179
    %v503 = vadd.f32 %v502, %v195
    %v504 = vadd.f32 %v503, %v211
    %v505 = vsel %vm244, %v227, 0.0
    %v506 = vadd.f32 %v504, %v505
    %v507 = vrot.slane %v506, 4
    %v508 = vadd.f32 %v506, %v507
    %v509 = vrot.slane %v508, 2
    %v510 = vadd.f32 %v508, %v509
    %v511 = vrot.slane %v510, 1
    %v512 = vadd.f32 %v510, %v511
    %v513 = vadd.f32 %v132, %v148
    %v514 = vadd.f32 %v513, %v164
    %v515 = vadd.f32 %v514, %v180
    %v516 = vadd.f32 %v515, %v196
    %v517 = vadd.f32 %v516, %v212
    %v518 = vsel %vm244, %v228, 0.0
    %v519 = vadd.f32 %v517, %v518
    %v520 = vrot.slane %v519, 4
    %v521 = vadd.f32 %v519, %v520
    %v522 = vrot.slane %v521, 2
    %v523 = vadd.f32 %v521, %v522
    %v524 = vrot.slane %v523, 1
    %v525 = vadd.f32 %v523, %v524
    %v526 = vadd.f32 %v133, %v149
    %v527 = vadd.f32 %v526, %v165
    %v528 = vadd.f32 %v527, %v181
    %v529 = vadd.f32 %v528, %v197
    %v530 = vadd.f32 %v529, %v213
    %v531 = vsel %vm244, %v229, 0.0
    %v532 = vadd.f32 %v530, %v531
    %v533 = vrot.slane %v532, 4
    %v534 = vadd.f32 %v532, %v533
    %v535 = vrot.slane %v534, 2
    %v536 = vadd.f32 %v534, %v535
    %v537 = vrot.slane %v536, 1
    %v538 = vadd.f32 %v536, %v537
    %v539 = vadd.f32 %v134, %v150
    %v540 = vadd.f32 %v539, %v166
    %v541 = vadd.f32 %v540, %v182
    %v542 = vadd.f32 %v541, %v198
    %v543 = vadd.f32 %v542, %v214
    %v544 = vsel %vm244, %v230, 0.0
    %v545 = vadd.f32 %v543, %v544
    %v546 = vrot.slane %v545, 4
    %v547 = vadd.f32 %v545, %v546
    %v548 = vrot.slane %v547, 2
    %v549 = vadd.f32 %v547, %v548
    %v550 = vrot.slane %v549, 1
    %v551 = vadd.f32 %v549, %v550
    %v552 = vadd.f32 %v135, %v151
    %v553 = vadd.f32 %v552, %v167
    %v554 = vadd.f32 %v553, %v183
    %v555 = vadd.f32 %v554, %v199
    %v556 = vadd.f32 %v555, %v215
    %v557 = vsel %vm244, %v231, 0.0
    %v558 = vadd.f32 %v556, %v557
    %v559 = vrot.slane %v558, 4
    %v560 = vadd.f32 %v558, %v559
    %v561 = vrot.slane %v560, 2
    %v562 = vadd.f32 %v560, %v561
    %v563 = vrot.slane %v562, 1
    %v564 = vadd.f32 %v562, %v563
    %v565 = vadd.f32 %v136, %v152
    %v566 = vadd.f32 %v565, %v168
    %v567 = vadd.f32 %v566, %v184
    %v568 = vadd.f32 %v567, %v200
    %v569 = vadd.f32 %v568, %v216
    %v570 = vsel %vm244, %v232, 0.0
    %v571 = vadd.f32 %v569, %v570
    %v572 = vrot.slane %v571, 4
    %v573 = vadd.f32 %v571, %v572
    %v574 = vrot.slane %v573, 2
    %v575 = vadd.f32 %v573, %v574
    %v576 = vrot.slane %v575, 1
    %v577 = vadd.f32 %v575, %v576
    %v578 = vadd.f32 %v137, %v153
    %v579 = vadd.f32 %v578, %v169
    %v580 = vadd.f32 %v579, %v185
    %v581 = vadd.f32 %v580, %v201
    %v582 = vadd.f32 %v581, %v217
    %v583 = vsel %vm244, %v233, 0.0
    %v584 = vadd.f32 %v582, %v583
    %v585 = vrot.slane %v584, 4
    %v586 = vadd.f32 %v584, %v585
    %v587 = vrot.slane %v586, 2
    %v588 = vadd.f32 %v586, %v587
    %v589 = vrot.slane %v588, 1
    %v590 = vadd.f32 %v588, %v589
    %v591 = vadd.f32 %v138, %v154
    %v592 = vadd.f32 %v591, %v170
    %v593 = vadd.f32 %v592, %v186
    %v594 = vadd.f32 %v593, %v202
    %v595 = vadd.f32 %v594, %v218
    %v596 = vsel %vm244, %v234, 0.0
    %v597 = vadd.f32 %v595, %v596
    %v598 = vrot.slane %v597, 4
    %v599 = vadd.f32 %v597, %v598
    %v600 = vrot.slane %v599, 2
    %v601 = vadd.f32 %v599, %v600
    %v602 = vrot.slane %v601, 1
    %v603 = vadd.f32 %v601, %v602
    %v604 = vadd.f32 %v139, %v155
    %v605 = vadd.f32 %v604, %v171
    %v606 = vadd.f32 %v605, %v187
    %v607 = vadd.f32 %v606, %v203
    %v608 = vadd.f32 %v607, %v219
    %v609 = vsel %vm244, %v235, 0.0
    %v610 = vadd.f32 %v608, %v609
    %v611 = vrot.slane %v610, 4
    %v612 = vadd.f32 %v610, %v611
    %v613 = vrot.slane %v612, 2
    %v614 = vadd.f32 %v612, %v613
    %v615 = vrot.slane %v614, 1
    %v616 = vadd.f32 %v614, %v615
    %v617 = vadd.f32 %v140, %v156
    %v618 = vadd.f32 %v617, %v172
    %v619 = vadd.f32 %v618, %v188
    %v620 = vadd.f32 %v619, %v204
    %v621 = vadd.f32 %v620, %v220
    %v622 = vsel %vm244, %v236, 0.0
    %v623 = vadd.f32 %v621, %v622
    %v624 = vrot.slane %v623, 4
    %v625 = vadd.f32 %v623, %v624
    %v626 = vrot.slane %v625, 2
    %v627 = vadd.f32 %v625, %v626
    %v628 = vrot.slane %v627, 1
    %v629 = vadd.f32 %v627, %v628
    %v630 = vadd.f32 %v141, %v157
    %v631 = vadd.f32 %v630, %v173
    %v632 = vadd.f32 %v631, %v189
    %v633 = vadd.f32 %v632, %v205
    %v634 = vadd.f32 %v633, %v221
    %v635 = vsel %vm244, %v237, 0.0
    %v636 = vadd.f32 %v634, %v635
    %v637 = vrot.slane %v636, 4
    %v638 = vadd.f32 %v636, %v637
    %v639 = vrot.slane %v638, 2
    %v640 = vadd.f32 %v638, %v639
    %v641 = vrot.slane %v640, 1
    %v642 = vadd.f32 %v640, %v641
    %v643 = vadd.f32 %v142, %v158
    %v644 = vadd.f32 %v643, %v174
    %v645 = vadd.f32 %v644, %v190
    %v646 = vadd.f32 %v645, %v206
    %v647 = vadd.f32 %v646, %v222
    %v648 = vsel %vm244, %v238, 0.0
    %v649 = vadd.f32 %v647, %v648
    %v650 = vrot.slane %v649, 4
    %v651 = vadd.f32 %v649, %v650
    %v652 = vrot.slane %v651, 2
    %v653 = vadd.f32 %v651, %v652
    %v654 = vrot.slane %v653, 1
    %v655 = vadd.f32 %v653, %v654
    %v656 = vmax.f32 %v252, 0.0
    %v657 = vmax.f32 %v265, 0.0
    %v658 = vmax.f32 %v278, 0.0
    %v659 = vmax.f32 %v291, 0.0
    %v660 = vmax.f32 %v304, 0.0
    %v661 = vmax.f32 %v317, 0.0
    %v662 = vmax.f32 %v330, 0.0
    %v663 = vmax.f32 %v343, 0.0
    %v664 = vmax.f32 %v356, 0.0
    %v665 = vmax.f32 %v369, 0.0
    %v666 = vmax.f32 %v382, 0.0
    %v667 = vmax.f32 %v395, 0.0
    %v668 = vmax.f32 %v408, 0.0
    %v669 = vmax.f32 %v421, 0.0
    %v670 = vmax.f32 %v434, 0.0
    %v671 = vmax.f32 %v447, 0.0
    %v672 = vmax.f32 %v460, 0.0
    %v673 = vmax.f32 %v473, 0.0
    %v674 = vmax.f32 %v486, 0.0
    %v675 = vmax.f32 %v499, 0.0
    %v676 = vmax.f32 %v512, 0.0
    %v677 = vmax.f32 %v525, 0.0
    %v678 = vmax.f32 %v538, 0.0
    %v679 = vmax.f32 %v551, 0.0
    %v680 = vmax.f32 %v564, 0.0
    %v681 = vmax.f32 %v577, 0.0
    %v682 = vmax.f32 %v590, 0.0
    %v683 = vmax.f32 %v603, 0.0
    %v684 = vmax.f32 %v616, 0.0
    %v685 = vmax.f32 %v629, 0.0
    %v686 = vmax.f32 %v642, 0.0
    %v687 = vmax.f32 %v655, 0.0
    %v688 = vld [vmem:[%s1] sm:$0xff]
    %v689 = vld [vmem:[%s1 + $0x8] sm:$0xff]
    %v690 = vld [vmem:[%s1 + $0x10] sm:$0xff]
    %v691 = vld [vmem:[%s1 + $0x18] sm:$0xff]
    %v692 = vld [vmem:[%s1 + $0x20] sm:$0xff]
    %v693 = vld [vmem:[%s1 + $0x28] sm:$0xff]
    %v694 = vld [vmem:[%s1 + $0x30] sm:$0xff]
    %v695 = vld [vmem:[%s1 + $0x38] sm:$0xff]
    %v696 = vld [vmem:[%s1 + $0x40] sm:$0xff]
    %v697 = vld [vmem:[%s1 + $0x48] sm:$0xff]
    %v698 = vld [vmem:[%s1 + $0x50] sm:$0xff]
    %v699 = vld [vmem:[%s1 + $0x58] sm:$0xff]
    %v700 = vld [vmem:[%s1 + $0x60] sm:$0xff]
    %v701 = vld [vmem:[%s1 + $0x68] sm:$0xff]
    %v702 = vld [vmem:[%s1 + $0x70] sm:$0xff]
    %v703 = vld [vmem:[%s1 + $0x78] sm:$0xff]
    %v704 = vld [vmem:[%s1 + $0x80] sm:$0xff]
    %v705 = vld [vmem:[%s1 + $0x88] sm:$0xff]
    %v706 = vld [vmem:[%s1 + $0x90] sm:$0xff]
    %v707 = vld [vmem:[%s1 + $0x98] sm:$0xff]
    %v708 = vld [vmem:[%s1 + $0xa0] sm:$0xff]
    %v709 = vld [vmem:[%s1 + $0xa8] sm:$0xff]
    %v710 = vld [vmem:[%s1 + $0xb0] sm:$0xff]
    %v711 = vld [vmem:[%s1 + $0xb8] sm:$0xff]
    %v712 = vld [vmem:[%s1 + $0xc0] sm:$0xff]
    %v713 = vld [vmem:[%s1 + $0xc8] sm:$0xff]
    %v714 = vld [vmem:[%s1 + $0xd0] sm:$0xff]
    %v715 = vld [vmem:[%s1 + $0xd8] sm:$0xff]
    %v716 = vld [vmem:[%s1 + $0xe0] sm:$0xff]
    %v717 = vld [vmem:[%s1 + $0xe8] sm:$0xff]
    %v718 = vld [vmem:[%s1 + $0xf0] sm:$0xff]
    %v719 = vld [vmem:[%s1 + $0xf8] sm:$0xff]
    %v720 = vld [vmem:[%s1 + $0x100] sm:$0xff]
    %v721 = vld [vmem:[%s1 + $0x108] sm:$0xff]
    %v722 = vld [vmem:[%s1 + $0x110] sm:$0xff]
    %v723 = vld [vmem:[%s1 + $0x118] sm:$0xff]
    %v724 = vld [vmem:[%s1 + $0x120] sm:$0xff]
    %v725 = vld [vmem:[%s1 + $0x128] sm:$0xff]
    %v726 = vld [vmem:[%s1 + $0x130] sm:$0xff]
    %v727 = vld [vmem:[%s1 + $0x138] sm:$0xff]
    %v728 = vld [vmem:[%s1 + $0x140] sm:$0xff]
    %v729 = vld [vmem:[%s1 + $0x148] sm:$0xff]
    %v730 = vld [vmem:[%s1 + $0x150] sm:$0xff]
    %v731 = vld [vmem:[%s1 + $0x158] sm:$0xff]
    %v732 = vld [vmem:[%s1 + $0x160] sm:$0xff]
    %v733 = vld [vmem:[%s1 + $0x168] sm:$0xff]
    %v734 = vld [vmem:[%s1 + $0x170] sm:$0xff]
    %v735 = vld [vmem:[%s1 + $0x178] sm:$0xff]
    %v736 = vld [vmem:[%s1 + $0x180] sm:$0xff]
    %v737 = vld [vmem:[%s1 + $0x188] sm:$0xff]
    %v738 = vld [vmem:[%s1 + $0x190] sm:$0xff]
    %v739 = vld [vmem:[%s1 + $0x198] sm:$0xff]
    %v740 = vld [vmem:[%s1 + $0x1a0] sm:$0xff]
    %v741 = vld [vmem:[%s1 + $0x1a8] sm:$0xff]
    %v742 = vld [vmem:[%s1 + $0x1b0] sm:$0xff]
    %v743 = vld [vmem:[%s1 + $0x1b8] sm:$0xff]
    %v744 = vld [vmem:[%s1 + $0x1c0] sm:$0xff]
    %v745 = vld [vmem:[%s1 + $0x1c8] sm:$0xff]
    %v746 = vld [vmem:[%s1 + $0x1d0] sm:$0xff]
    %v747 = vld [vmem:[%s1 + $0x1d8] sm:$0xff]
    %v748 = vld [vmem:[%s1 + $0x1e0] sm:$0xff]
    %v749 = vld [vmem:[%s1 + $0x1e8] sm:$0xff]
    %v750 = vld [vmem:[%s1 + $0x1f0] sm:$0xff]
    %v751 = vld [vmem:[%s1 + $0x1f8] sm:$0xff]
    %v752 = vld [vmem:[%s1 + $0x200] sm:$0xff]
    %v753 = vld [vmem:[%s1 + $0x208] sm:$0xff]
    %v754 = vld [vmem:[%s1 + $0x210] sm:$0xff]
    %v755 = vld [vmem:[%s1 + $0x218] sm:$0xff]
    %v756 = vld [vmem:[%s1 + $0x220] sm:$0xff]
    %v757 = vld [vmem:[%s1 + $0x228] sm:$0xff]
    %v758 = vld [vmem:[%s1 + $0x230] sm:$0xff]
    %v759 = vld [vmem:[%s1 + $0x238] sm:$0xff]
    %v760 = vld [vmem:[%s1 + $0x240] sm:$0xff]
    %v761 = vld [vmem:[%s1 + $0x248] sm:$0xff]
    %v762 = vld [vmem:[%s1 + $0x250] sm:$0xff]
    %v763 = vld [vmem:[%s1 + $0x258] sm:$0xff]
    %v764 = vld [vmem:[%s1 + $0x260] sm:$0xff]
    %v765 = vld [vmem:[%s1 + $0x268] sm:$0xff]
    %v766 = vld [vmem:[%s1 + $0x270] sm:$0xff]
    %v767 = vld [vmem:[%s1 + $0x278] sm:$0xff]
    %v768 = vld [vmem:[%s1 + $0x280] sm:$0xff]
    %v769 = vld [vmem:[%s1 + $0x288] sm:$0xff]
    %v770 = vld [vmem:[%s1 + $0x290] sm:$0xff]
    %v771 = vld [vmem:[%s1 + $0x298] sm:$0xff]
    %v772 = vld [vmem:[%s1 + $0x2a0] sm:$0xff]
    %v773 = vld [vmem:[%s1 + $0x2a8] sm:$0xff]
    %v774 = vld [vmem:[%s1 + $0x2b0] sm:$0xff]
    %v775 = vld [vmem:[%s1 + $0x2b8] sm:$0xff]
    %v776 = vld [vmem:[%s1 + $0x2c0] sm:$0xff]
    %v777 = vld [vmem:[%s1 + $0x2c8] sm:$0xff]
    %v778 = vld [vmem:[%s1 + $0x2d0] sm:$0xff]
    %v779 = vld [vmem:[%s1 + $0x2d8] sm:$0xff]
    %v780 = vld [vmem:[%s1 + $0x2e0] sm:$0xff]
    %v781 = vld [vmem:[%s1 + $0x2e8] sm:$0xff]
    %v782 = vld [vmem:[%s1 + $0x2f0] sm:$0xff]
    %v783 = vld [vmem:[%s1 + $0x2f8] sm:$0xff]
    %v784 = vld [vmem:[%s1 + $0x300] sm:$0xff]
    %v785 = vld [vmem:[%s1 + $0x308] sm:$0xff]
    %v786 = vld [vmem:[%s1 + $0x310] sm:$0xff]
    %v787 = vld [vmem:[%s1 + $0x318] sm:$0xff]
    %v788 = vld [vmem:[%s1 + $0x320] sm:$0xff]
    %v789 = vld [vmem:[%s1 + $0x328] sm:$0xff]
    %v790 = vld [vmem:[%s1 + $0x330] sm:$0xff]
    %v791 = vld [vmem:[%s1 + $0x338] sm:$0xff]
    %v792 = vld [vmem:[%s1 + $0x340] sm:$0xff]
    %v793 = vld [vmem:[%s1 + $0x348] sm:$0xff]
    %v794 = vld [vmem:[%s1 + $0x350] sm:$0xff]
    %v795 = vld [vmem:[%s1 + $0x358] sm:$0xff]
    %v796 = vld [vmem:[%s1 + $0x360] sm:$0xff]
    %v797 = vld [vmem:[%s1 + $0x368] sm:$0xff]
    %v798 = vld [vmem:[%s1 + $0x370] sm:$0xff]
    %v799 = vld [vmem:[%s1 + $0x378] sm:$0xff]
    %v800 = vld [vmem:[%s1 + $0x380] sm:$0xff]
    %v801 = vld [vmem:[%s1 + $0x388] sm:$0xff]
    %v802 = vld [vmem:[%s1 + $0x390] sm:$0xff]
    %v803 = vld [vmem:[%s1 + $0x398] sm:$0xff]
    %v804 = vld [vmem:[%s1 + $0x3a0] sm:$0xff]
    %v805 = vld [vmem:[%s1 + $0x3a8] sm:$0xff]
    %v806 = vld [vmem:[%s1 + $0x3b0] sm:$0xff]
    %v807 = vld [vmem:[%s1 + $0x3b8] sm:$0xff]
    %v808 = vld [vmem:[%s1 + $0x3c0] sm:$0xff]
    %v809 = vld [vmem:[%s1 + $0x3c8] sm:$0xff]
    %v810 = vld [vmem:[%s1 + $0x3d0] sm:$0xff]
    %v811 = vld [vmem:[%s1 + $0x3d8] sm:$0xff]
    %v812 = vld [vmem:[%s1 + $0x3e0] sm:$0xff]
    %v813 = vld [vmem:[%s1 + $0x3e8] sm:$0xff]
    %v814 = vld [vmem:[%s1 + $0x3f0] sm:$0xff]
    %v815 = vld [vmem:[%s1 + $0x3f8] sm:$0xff]
    %v816 = vld [vmem:[%s1 + $0x400] sm:$0xff]
    %v817 = vld [vmem:[%s1 + $0x408] sm:$0xff]
    %v818 = vld [vmem:[%s1 + $0x410] sm:$0xff]
    %v819 = vld [vmem:[%s1 + $0x418] sm:$0xff]
    %v820 = vld [vmem:[%s1 + $0x420] sm:$0xff]
    %v821 = vld [vmem:[%s1 + $0x428] sm:$0xff]
    %v822 = vld [vmem:[%s1 + $0x430] sm:$0xff]
    %v823 = vld [vmem:[%s1 + $0x438] sm:$0xff]
    %v824 = vld [vmem:[%s1 + $0x440] sm:$0xff]
    %v825 = vld [vmem:[%s1 + $0x448] sm:$0xff]
    %v826 = vld [vmem:[%s1 + $0x450] sm:$0xff]
    %v827 = vld [vmem:[%s1 + $0x458] sm:$0xff]
    %v828 = vld [vmem:[%s1 + $0x460] sm:$0xff]
    %v829 = vld [vmem:[%s1 + $0x468] sm:$0xff]
    %v830 = vld [vmem:[%s1 + $0x470] sm:$0xff]
    %v831 = vld [vmem:[%s1 + $0x478] sm:$0xff]
    %v832 = vld [vmem:[%s1 + $0x480] sm:$0xff]
    %v833 = vld [vmem:[%s1 + $0x488] sm:$0xff]
    %v834 = vld [vmem:[%s1 + $0x490] sm:$0xff]
    %v835 = vld [vmem:[%s1 + $0x498] sm:$0xff]
    %v836 = vld [vmem:[%s1 + $0x4a0] sm:$0xff]
    %v837 = vld [vmem:[%s1 + $0x4a8] sm:$0xff]
    %v838 = vld [vmem:[%s1 + $0x4b0] sm:$0xff]
    %v839 = vld [vmem:[%s1 + $0x4b8] sm:$0xff]
    %v840 = vld [vmem:[%s1 + $0x4c0] sm:$0xff]
    %v841 = vld [vmem:[%s1 + $0x4c8] sm:$0xff]
    %v842 = vld [vmem:[%s1 + $0x4d0] sm:$0xff]
    %v843 = vld [vmem:[%s1 + $0x4d8] sm:$0xff]
    %v844 = vld [vmem:[%s1 + $0x4e0] sm:$0xff]
    %v845 = vld [vmem:[%s1 + $0x4e8] sm:$0xff]
    %v846 = vld [vmem:[%s1 + $0x4f0] sm:$0xff]
    %v847 = vld [vmem:[%s1 + $0x4f8] sm:$0xff]
    %v848 = vld [vmem:[%s1 + $0x500] sm:$0xff]
    %v849 = vld [vmem:[%s1 + $0x508] sm:$0xff]
    %v850 = vld [vmem:[%s1 + $0x510] sm:$0xff]
    %v851 = vld [vmem:[%s1 + $0x518] sm:$0xff]
    %v852 = vld [vmem:[%s1 + $0x520] sm:$0xff]
    %v853 = vld [vmem:[%s1 + $0x528] sm:$0xff]
    %v854 = vld [vmem:[%s1 + $0x530] sm:$0xff]
    %v855 = vld [vmem:[%s1 + $0x538] sm:$0xff]
    %v856 = vld [vmem:[%s1 + $0x540] sm:$0xff]
    %v857 = vld [vmem:[%s1 + $0x548] sm:$0xff]
    %v858 = vld [vmem:[%s1 + $0x550] sm:$0xff]
    %v859 = vld [vmem:[%s1 + $0x558] sm:$0xff]
    %v860 = vld [vmem:[%s1 + $0x560] sm:$0xff]
    %v861 = vld [vmem:[%s1 + $0x568] sm:$0xff]
    %v862 = vld [vmem:[%s1 + $0x570] sm:$0xff]
    %v863 = vld [vmem:[%s1 + $0x578] sm:$0xff]
    %v864 = vld [vmem:[%s1 + $0x580] sm:$0xff]
    %v865 = vld [vmem:[%s1 + $0x588] sm:$0xff]
    %v866 = vld [vmem:[%s1 + $0x590] sm:$0xff]
    %v867 = vld [vmem:[%s1 + $0x598] sm:$0xff]
    %v868 = vld [vmem:[%s1 + $0x5a0] sm:$0xff]
    %v869 = vld [vmem:[%s1 + $0x5a8] sm:$0xff]
    %v870 = vld [vmem:[%s1 + $0x5b0] sm:$0xff]
    %v871 = vld [vmem:[%s1 + $0x5b8] sm:$0xff]
    %v872 = vld [vmem:[%s1 + $0x5c0] sm:$0xff]
    %v873 = vld [vmem:[%s1 + $0x5c8] sm:$0xff]
    %v874 = vld [vmem:[%s1 + $0x5d0] sm:$0xff]
    %v875 = vld [vmem:[%s1 + $0x5d8] sm:$0xff]
    %v876 = vld [vmem:[%s1 + $0x5e0] sm:$0xff]
    %v877 = vld [vmem:[%s1 + $0x5e8] sm:$0xff]
    %v878 = vld [vmem:[%s1 + $0x5f0] sm:$0xff]
    %v879 = vld [vmem:[%s1 + $0x5f8] sm:$0xff]
    %v880 = vld [vmem:[%s1 + $0x600] sm:$0xff]
    %v881 = vld [vmem:[%s1 + $0x608] sm:$0xff]
    %v882 = vld [vmem:[%s1 + $0x610] sm:$0xff]
    %v883 = vld [vmem:[%s1 + $0x618] sm:$0xff]
    %v884 = vld [vmem:[%s1 + $0x620] sm:$0xff]
    %v885 = vld [vmem:[%s1 + $0x628] sm:$0xff]
    %v886 = vld [vmem:[%s1 + $0x630] sm:$0xff]
    %v887 = vld [vmem:[%s1 + $0x638] sm:$0xff]
    %v888 = vld [vmem:[%s1 + $0x640] sm:$0xff]
    %v889 = vld [vmem:[%s1 + $0x648] sm:$0xff]
    %v890 = vld [vmem:[%s1 + $0x650] sm:$0xff]
    %v891 = vld [vmem:[%s1 + $0x658] sm:$0xff]
    %v892 = vld [vmem:[%s1 + $0x660] sm:$0xff]
    %v893 = vld [vmem:[%s1 + $0x668] sm:$0xff]
    %v894 = vld [vmem:[%s1 + $0x670] sm:$0xff]
    %v895 = vld [vmem:[%s1 + $0x678] sm:$0xff]
    %v896 = vld [vmem:[%s1 + $0x680] sm:$0xff]
    %v897 = vld [vmem:[%s1 + $0x688] sm:$0xff]
    %v898 = vld [vmem:[%s1 + $0x690] sm:$0xff]
    %v899 = vld [vmem:[%s1 + $0x698] sm:$0xff]
    %v900 = vld [vmem:[%s1 + $0x6a0] sm:$0xff]
    %v901 = vld [vmem:[%s1 + $0x6a8] sm:$0xff]
    %v902 = vld [vmem:[%s1 + $0x6b0] sm:$0xff]
    %v903 = vld [vmem:[%s1 + $0x6b8] sm:$0xff]
    %v904 = vld [vmem:[%s1 + $0x6c0] sm:$0xff]
    %v905 = vld [vmem:[%s1 + $0x6c8] sm:$0xff]
    %v906 = vld [vmem:[%s1 + $0x6d0] sm:$0xff]
    %v907 = vld [vmem:[%s1 + $0x6d8] sm:$0xff]
    %v908 = vld [vmem:[%s1 + $0x6e0] sm:$0xff]
    %v909 = vld [vmem:[%s1 + $0x6e8] sm:$0xff]
    %v910 = vld [vmem:[%s1 + $0x6f0] sm:$0xff]
    %v911 = vld [vmem:[%s1 + $0x6f8] sm:$0xff]
    %v912 = vld [vmem:[%s1 + $0x700] sm:$0xff]
    %v913 = vld [vmem:[%s1 + $0x708] sm:$0xff]
    %v914 = vld [vmem:[%s1 + $0x710] sm:$0xff]
    %v915 = vld [vmem:[%s1 + $0x718] sm:$0xff]
    %v916 = vld [vmem:[%s1 + $0x720] sm:$0xff]
    %v917 = vld [vmem:[%s1 + $0x728] sm:$0xff]
    %v918 = vld [vmem:[%s1 + $0x730] sm:$0xff]
    %v919 = vld [vmem:[%s1 + $0x738] sm:$0xff]
    %v920 = vld [vmem:[%s1 + $0x740] sm:$0xff]
    %v921 = vld [vmem:[%s1 + $0x748] sm:$0xff]
    %v922 = vld [vmem:[%s1 + $0x750] sm:$0xff]
    %v923 = vld [vmem:[%s1 + $0x758] sm:$0xff]
    %v924 = vld [vmem:[%s1 + $0x760] sm:$0xff]
    %v925 = vld [vmem:[%s1 + $0x768] sm:$0xff]
    %v926 = vld [vmem:[%s1 + $0x770] sm:$0xff]
    %v927 = vld [vmem:[%s1 + $0x778] sm:$0xff]
    %v928 = vld [vmem:[%s1 + $0x780] sm:$0xff]
    %v929 = vld [vmem:[%s1 + $0x788] sm:$0xff]
    %v930 = vld [vmem:[%s1 + $0x790] sm:$0xff]
    %v931 = vld [vmem:[%s1 + $0x798] sm:$0xff]
    %v932 = vld [vmem:[%s1 + $0x7a0] sm:$0xff]
    %v933 = vld [vmem:[%s1 + $0x7a8] sm:$0xff]
    %v934 = vld [vmem:[%s1 + $0x7b0] sm:$0xff]
    %v935 = vld [vmem:[%s1 + $0x7b8] sm:$0xff]
    %v936 = vld [vmem:[%s1 + $0x7c0] sm:$0xff]
    %v937 = vld [vmem:[%s1 + $0x7c8] sm:$0xff]
    %v938 = vld [vmem:[%s1 + $0x7d0] sm:$0xff]
    %v939 = vld [vmem:[%s1 + $0x7d8] sm:$0xff]
    %v940 = vld [vmem:[%s1 + $0x7e0] sm:$0xff]
    %v941 = vld [vmem:[%s1 + $0x7e8] sm:$0xff]
    %v942 = vld [vmem:[%s1 + $0x7f0] sm:$0xff]
    %v943 = vld [vmem:[%s1 + $0x7f8] sm:$0xff]
    %v944 = vld [vmem:[%s2] sm:$0x1]
    %v946 = vlaneseq
    %v947 = vshrl.u32 %v946, 7
    %v948 = vsub.s32 0, %v947
    %v949 = vrot.slane %v944, %v948
    %vm983 = vcmask 1041409
    %v984 = vsel %vm983, %v672, %v656
    %v985 = vsel %vm983, %v673, %v657
    %v986 = vsel %vm983, %v674, %v658
    %v987 = vsel %vm983, %v675, %v659
    %v988 = vsel %vm983, %v676, %v660
    %v989 = vsel %vm983, %v677, %v661
    %v990 = vsel %vm983, %v678, %v662
    %v991 = vsel %vm983, %v679, %v663
    %v992 = vsel %vm983, %v680, %v664
    %v993 = vsel %vm983, %v681, %v665
    %v994 = vsel %vm983, %v682, %v666
    %v995 = vsel %vm983, %v683, %v667
    %v996 = vsel %vm983, %v684, %v668
    %v997 = vsel %vm983, %v685, %v669
    %v998 = vsel %vm983, %v686, %v670
    %v999 = vsel %vm983, %v687, %v671
    %1016 = vmatprep.subr.mxu0 0.0
    %1017 = vmatpush1.msra.mxu0 %v688
    %1018 = vmatprep.subr.mxu0 0.0
    %1019 = vmatpush1.msra.mxu0 %v689
    %1020 = vmatprep.subr.mxu0 0.0
    %1021 = vmatpush1.msra.mxu0 %v690
    %1022 = vmatprep.subr.mxu0 0.0
    %1023 = vmatpush1.msra.mxu0 %v691
    %1024 = vmatprep.subr.mxu0 0.0
    %1025 = vmatpush1.msra.mxu0 %v692
    %1026 = vmatprep.subr.mxu0 0.0
    %1027 = vmatpush1.msra.mxu0 %v693
    %1028 = vmatprep.subr.mxu0 0.0
    %1029 = vmatpush1.msra.mxu0 %v694
    %1030 = vmatprep.subr.mxu0 0.0
    %1031 = vmatpush1.msra.mxu0 %v695
    %1032 = vmatprep.subr.mxu0 0.0
    %1033 = vmatpush1.msra.mxu0 %v696
    %1034 = vmatprep.subr.mxu0 0.0
    %1035 = vmatpush1.msra.mxu0 %v697
    %1036 = vmatprep.subr.mxu0 0.0
    %1037 = vmatpush1.msra.mxu0 %v698
    %1038 = vmatprep.subr.mxu0 0.0
    %1039 = vmatpush1.msra.mxu0 %v699
    %1040 = vmatprep.subr.mxu0 0.0
    %1041 = vmatpush1.msra.mxu0 %v700
    %1042 = vmatprep.subr.mxu0 0.0
    %1043 = vmatpush1.msra.mxu0 %v701
    %1044 = vmatprep.subr.mxu0 0.0
    %1045 = vmatpush1.msra.mxu0 %v702
    %1046 = vmatprep.subr.mxu0 0.0
    %1047 = vmatpush1.msra.mxu0 %v703
    %1048 = vmatprep.subr.mxu0 0.0
    %1049 = vmatpush1.msra.mxu0 %v704
    %1050 = vmatprep.subr.mxu0 0.0
    %1051 = vmatpush1.msra.mxu0 %v705
    %1052 = vmatprep.subr.mxu0 0.0
    %1053 = vmatpush1.msra.mxu0 %v706
    %1054 = vmatprep.subr.mxu0 0.0
    %1055 = vmatpush1.msra.mxu0 %v707
    %1056 = vmatprep.subr.mxu0 0.0
    %1057 = vmatpush1.msra.mxu0 %v708
    %1058 = vmatprep.subr.mxu0 0.0
    %1059 = vmatpush1.msra.mxu0 %v709
    %1060 = vmatprep.subr.mxu0 0.0
    %1061 = vmatpush1.msra.mxu0 %v710
    %1062 = vmatprep.subr.mxu0 0.0
    %1063 = vmatpush1.msra.mxu0 %v711
    %1064 = vmatprep.subr.mxu0 0.0
    %1065 = vmatpush1.msra.mxu0 %v712
    %1066 = vmatprep.subr.mxu0 0.0
    %1067 = vmatpush1.msra.mxu0 %v713
    %1068 = vmatprep.subr.mxu0 0.0
    %1069 = vmatpush1.msra.mxu0 %v714
    %1070 = vmatprep.subr.mxu0 0.0
    %1071 = vmatpush1.msra.mxu0 %v715
    %1072 = vmatprep.subr.mxu0 0.0
    %1073 = vmatpush1.msra.mxu0 %v716
    %1074 = vmatprep.subr.mxu0 0.0
    %1075 = vmatpush1.msra.mxu0 %v717
    %1076 = vmatprep.subr.mxu0 0.0
    %1077 = vmatpush1.msra.mxu0 %v718
    %1078 = vmatprep.subr.mxu0 0.0
    %1079 = vmatpush1.msra.mxu0 %v719
    %1080 = vmatprep.mubr.f32.mxu0 %v985
    %1081 = vmatmul.mubr.f32.gmra.mrb[0].mxu0 %v984
    %v1082 = vpop.f32.mrb[0].mxu0
    %v1083 = vadd.f32 %v949, %v1082
    %v1084 = vpop.f32.mrb[0].mxu0
    %1085 = vdwg.mxu0
    %1086 = vmatprep.subr.mxu0 0.0
    %1087 = vmatpush1.msra.mxu0 %v720
    %1088 = vmatprep.subr.mxu0 0.0
    %1089 = vmatpush1.msra.mxu0 %v721
    %1090 = vmatprep.subr.mxu0 0.0
    %1091 = vmatpush1.msra.mxu0 %v722
    %1092 = vmatprep.subr.mxu0 0.0
    %1093 = vmatpush1.msra.mxu0 %v723
    %1094 = vmatprep.subr.mxu0 0.0
    %1095 = vmatpush1.msra.mxu0 %v724
    %1096 = vmatprep.subr.mxu0 0.0
    %1097 = vmatpush1.msra.mxu0 %v725
    %1098 = vmatprep.subr.mxu0 0.0
    %1099 = vmatpush1.msra.mxu0 %v726
    %1100 = vmatprep.subr.mxu0 0.0
    %1101 = vmatpush1.msra.mxu0 %v727
    %1102 = vmatprep.subr.mxu0 0.0
    %1103 = vmatpush1.msra.mxu0 %v728
    %1104 = vmatprep.subr.mxu0 0.0
    %1105 = vmatpush1.msra.mxu0 %v729
    %1106 = vmatprep.subr.mxu0 0.0
    %1107 = vmatpush1.msra.mxu0 %v730
    %1108 = vmatprep.subr.mxu0 0.0
    %1109 = vmatpush1.msra.mxu0 %v731
    %1110 = vmatprep.subr.mxu0 0.0
    %1111 = vmatpush1.msra.mxu0 %v732
    %1112 = vmatprep.subr.mxu0 0.0
    %1113 = vmatpush1.msra.mxu0 %v733
    %1114 = vmatprep.subr.mxu0 0.0
    %1115 = vmatpush1.msra.mxu0 %v734
    %1116 = vmatprep.subr.mxu0 0.0
    %1117 = vmatpush1.msra.mxu0 %v735
    %1118 = vmatprep.subr.mxu0 0.0
    %1119 = vmatpush1.msra.mxu0 %v736
    %1120 = vmatprep.subr.mxu0 0.0
    %1121 = vmatpush1.msra.mxu0 %v737
    %1122 = vmatprep.subr.mxu0 0.0
    %1123 = vmatpush1.msra.mxu0 %v738
    %1124 = vmatprep.subr.mxu0 0.0
    %1125 = vmatpush1.msra.mxu0 %v739
    %1126 = vmatprep.subr.mxu0 0.0
    %1127 = vmatpush1.msra.mxu0 %v740
    %1128 = vmatprep.subr.mxu0 0.0
    %1129 = vmatpush1.msra.mxu0 %v741
    %1130 = vmatprep.subr.mxu0 0.0
    %1131 = vmatpush1.msra.mxu0 %v742
    %1132 = vmatprep.subr.mxu0 0.0
    %1133 = vmatpush1.msra.mxu0 %v743
    %1134 = vmatprep.subr.mxu0 0.0
    %1135 = vmatpush1.msra.mxu0 %v744
    %1136 = vmatprep.subr.mxu0 0.0
    %1137 = vmatpush1.msra.mxu0 %v745
    %1138 = vmatprep.subr.mxu0 0.0
    %1139 = vmatpush1.msra.mxu0 %v746
    %1140 = vmatprep.subr.mxu0 0.0
    %1141 = vmatpush1.msra.mxu0 %v747
    %1142 = vmatprep.subr.mxu0 0.0
    %1143 = vmatpush1.msra.mxu0 %v748
    %1144 = vmatprep.subr.mxu0 0.0
    %1145 = vmatpush1.msra.mxu0 %v749
    %1146 = vmatprep.subr.mxu0 0.0
    %1147 = vmatpush1.msra.mxu0 %v750
    %1148 = vmatprep.subr.mxu0 0.0
    %1149 = vmatpush1.msra.mxu0 %v751
    %1150 = vmatprep.mubr.f32.mxu0 %v987
    %1151 = vmatmul.mubr.f32.gmra.mrb[0].mxu0 %v986
    %v1152 = vpop.f32.mrb[0].mxu0
    %v1153 = vadd.f32 %v1083, %v1152
    %v1154 = vpop.f32.mrb[0].mxu0
    %1155 = vdwg.mxu0
    %1156 = vmatprep.subr.mxu0 0.0
    %1157 = vmatpush1.msra.mxu0 %v752
    %1158 = vmatprep.subr.mxu0 0.0
    %1159 = vmatpush1.msra.mxu0 %v753
    %1160 = vmatprep.subr.mxu0 0.0
    %1161 = vmatpush1.msra.mxu0 %v754
    %1162 = vmatprep.subr.mxu0 0.0
    %1163 = vmatpush1.msra.mxu0 %v755
    %1164 = vmatprep.subr.mxu0 0.0
    %1165 = vmatpush1.msra.mxu0 %v756
    %1166 = vmatprep.subr.mxu0 0.0
    %1167 = vmatpush1.msra.mxu0 %v757
    %1168 = vmatprep.subr.mxu0 0.0
    %1169 = vmatpush1.msra.mxu0 %v758
    %1170 = vmatprep.subr.mxu0 0.0
    %1171 = vmatpush1.msra.mxu0 %v759
    %1172 = vmatprep.subr.mxu0 0.0
    %1173 = vmatpush1.msra.mxu0 %v760
    %1174 = vmatprep.subr.mxu0 0.0
    %1175 = vmatpush1.msra.mxu0 %v761
    %1176 = vmatprep.subr.mxu0 0.0
    %1177 = vmatpush1.msra.mxu0 %v762
    %1178 = vmatprep.subr.mxu0 0.0
    %1179 = vmatpush1.msra.mxu0 %v763
    %1180 = vmatprep.subr.mxu0 0.0
    %1181 = vmatpush1.msra.mxu0 %v764
    %1182 = vmatprep.subr.mxu0 0.0
    %1183 = vmatpush1.msra.mxu0 %v765
    %1184 = vmatprep.subr.mxu0 0.0
    %1185 = vmatpush1.msra.mxu0 %v766
    %1186 = vmatprep.subr.mxu0 0.0
    %1187 = vmatpush1.msra.mxu0 %v767
    %1188 = vmatprep.subr.mxu0 0.0
    %1189 = vmatpush1.msra.mxu0 %v768
    %1190 = vmatprep.subr.mxu0 0.0
    %1191 = vmatpush1.msra.mxu0 %v769
    %1192 = vmatprep.subr.mxu0 0.0
    %1193 = vmatpush1.msra.mxu0 %v770
    %1194 = vmatprep.subr.mxu0 0.0
    %1195 = vmatpush1.msra.mxu0 %v771
    %1196 = vmatprep.subr.mxu0 0.0
    %1197 = vmatpush1.msra.mxu0 %v772
    %1198 = vmatprep.subr.mxu0 0.0
    %1199 = vmatpush1.msra.mxu0 %v773
    %1200 = vmatprep.subr.mxu0 0.0
    %1201 = vmatpush1.msra.mxu0 %v774
    %1202 = vmatprep.subr.mxu0 0.0
    %1203 = vmatpush1.msra.mxu0 %v775
    %1204 = vmatprep.subr.mxu0 0.0
    %1205 = vmatpush1.msra.mxu0 %v776
    %1206 = vmatprep.subr.mxu0 0.0
    %1207 = vmatpush1.msra.mxu0 %v777
    %1208 = vmatprep.subr.mxu0 0.0
    %1209 = vmatpush1.msra.mxu0 %v778
    %1210 = vmatprep.subr.mxu0 0.0
    %1211 = vmatpush1.msra.mxu0 %v779
    %1212 = vmatprep.subr.mxu0 0.0
    %1213 = vmatpush1.msra.mxu0 %v780
    %1214 = vmatprep.subr.mxu0 0.0
    %1215 = vmatpush1.msra.mxu0 %v781
    %1216 = vmatprep.subr.mxu0 0.0
    %1217 = vmatpush1.msra.mxu0 %v782
    %1218 = vmatprep.subr.mxu0 0.0
    %1219 = vmatpush1.msra.mxu0 %v783
    %1220 = vmatprep.mubr.f32.mxu0 %v989
    %1221 = vmatmul.mubr.f32.gmra.mrb[0].mxu0 %v988
    %v1222 = vpop.f32.mrb[0].mxu0
    %v1223 = vadd.f32 %v1153, %v1222
    %v1224 = vpop.f32.mrb[0].mxu0
    %1225 = vdwg.mxu0
    %1226 = vmatprep.subr.mxu0 0.0
    %1227 = vmatpush1.msra.mxu0 %v784
    %1228 = vmatprep.subr.mxu0 0.0
    %1229 = vmatpush1.msra.mxu0 %v785
    %1230 = vmatprep.subr.mxu0 0.0
    %1231 = vmatpush1.msra.mxu0 %v786
    %1232 = vmatprep.subr.mxu0 0.0
    %1233 = vmatpush1.msra.mxu0 %v787
    %1234 = vmatprep.subr.mxu0 0.0
    %1235 = vmatpush1.msra.mxu0 %v788
    %1236 = vmatprep.subr.mxu0 0.0
    %1237 = vmatpush1.msra.mxu0 %v789
    %1238 = vmatprep.subr.mxu0 0.0
    %1239 = vmatpush1.msra.mxu0 %v790
    %1240 = vmatprep.subr.mxu0 0.0
    %1241 = vmatpush1.msra.mxu0 %v791
    %1242 = vmatprep.subr.mxu0 0.0
    %1243 = vmatpush1.msra.mxu0 %v792
    %1244 = vmatprep.subr.mxu0 0.0
    %1245 = vmatpush1.msra.mxu0 %v793
    %1246 = vmatprep.subr.mxu0 0.0
    %1247 = vmatpush1.msra.mxu0 %v794
    %1248 = vmatprep.subr.mxu0 0.0
    %1249 = vmatpush1.msra.mxu0 %v795
    %1250 = vmatprep.subr.mxu0 0.0
    %1251 = vmatpush1.msra.mxu0 %v796
    %1252 = vmatprep.subr.mxu0 0.0
    %1253 = vmatpush1.msra.mxu0 %v797
    %1254 = vmatprep.subr.mxu0 0.0
    %1255 = vmatpush1.msra.mxu0 %v798
    %1256 = vmatprep.subr.mxu0 0.0
    %1257 = vmatpush1.msra.mxu0 %v799
    %1258 = vmatprep.subr.mxu0 0.0
    %1259 = vmatpush1.msra.mxu0 %v800
    %1260 = vmatprep.subr.mxu0 0.0
    %1261 = vmatpush1.msra.mxu0 %v801
    %1262 = vmatprep.subr.mxu0 0.0
    %1263 = vmatpush1.msra.mxu0 %v802
    %1264 = vmatprep.subr.mxu0 0.0
    %1265 = vmatpush1.msra.mxu0 %v803
    %1266 = vmatprep.subr.mxu0 0.0
    %1267 = vmatpush1.msra.mxu0 %v804
    %1268 = vmatprep.subr.mxu0 0.0
    %1269 = vmatpush1.msra.mxu0 %v805
    %1270 = vmatprep.subr.mxu0 0.0
    %1271 = vmatpush1.msra.mxu0 %v806
    %1272 = vmatprep.subr.mxu0 0.0
    %1273 = vmatpush1.msra.mxu0 %v807
    %1274 = vmatprep.subr.mxu0 0.0
    %1275 = vmatpush1.msra.mxu0 %v808
    %1276 = vmatprep.subr.mxu0 0.0
    %1277 = vmatpush1.msra.mxu0 %v809
    %1278 = vmatprep.subr.mxu0 0.0
    %1279 = vmatpush1.msra.mxu0 %v810
    %1280 = vmatprep.subr.mxu0 0.0
    %1281 = vmatpush1.msra.mxu0 %v811
    %1282 = vmatprep.subr.mxu0 0.0
    %1283 = vmatpush1.msra.mxu0 %v812
    %1284 = vmatprep.subr.mxu0 0.0
    %1285 = vmatpush1.msra.mxu0 %v813
    %1286 = vmatprep.subr.mxu0 0.0
    %1287 = vmatpush1.msra.mxu0 %v814
    %1288 = vmatprep.subr.mxu0 0.0
    %1289 = vmatpush1.msra.mxu0 %v815
    %1290 = vmatprep.mubr.f32.mxu0 %v991
    %1291 = vmatmul.mubr.f32.gmra.mrb[0].mxu0 %v990
    %v1292 = vpop.f32.mrb[0].mxu0
    %v1293 = vadd.f32 %v1223, %v1292
    %v1294 = vpop.f32.mrb[0].mxu0
    %1295 = vdwg.mxu0
    %1296 = vmatprep.subr.mxu0 0.0
    %1297 = vmatpush1.msra.mxu0 %v816
    %1298 = vmatprep.subr.mxu0 0.0
    %1299 = vmatpush1.msra.mxu0 %v817
    %1300 = vmatprep.subr.mxu0 0.0
    %1301 = vmatpush1.msra.mxu0 %v818
    %1302 = vmatprep.subr.mxu0 0.0
    %1303 = vmatpush1.msra.mxu0 %v819
    %1304 = vmatprep.subr.mxu0 0.0
    %1305 = vmatpush1.msra.mxu0 %v820
    %1306 = vmatprep.subr.mxu0 0.0
    %1307 = vmatpush1.msra.mxu0 %v821
    %1308 = vmatprep.subr.mxu0 0.0
    %1309 = vmatpush1.msra.mxu0 %v822
    %1310 = vmatprep.subr.mxu0 0.0
    %1311 = vmatpush1.msra.mxu0 %v823
    %1312 = vmatprep.subr.mxu0 0.0
    %1313 = vmatpush1.msra.mxu0 %v824
    %1314 = vmatprep.subr.mxu0 0.0
    %1315 = vmatpush1.msra.mxu0 %v825
    %1316 = vmatprep.subr.mxu0 0.0
    %1317 = vmatpush1.msra.mxu0 %v826
    %1318 = vmatprep.subr.mxu0 0.0
    %1319 = vmatpush1.msra.mxu0 %v827
    %1320 = vmatprep.subr.mxu0 0.0
    %1321 = vmatpush1.msra.mxu0 %v828
    %1322 = vmatprep.subr.mxu0 0.0
    %1323 = vmatpush1.msra.mxu0 %v829
    %1324 = vmatprep.subr.mxu0 0.0
    %1325 = vmatpush1.msra.mxu0 %v830
    %1326 = vmatprep.subr.mxu0 0.0
    %1327 = vmatpush1.msra.mxu0 %v831
    %1328 = vmatprep.subr.mxu0 0.0
    %1329 = vmatpush1.msra.mxu0 %v832
    %1330 = vmatprep.subr.mxu0 0.0
    %1331 = vmatpush1.msra.mxu0 %v833
    %1332 = vmatprep.subr.mxu0 0.0
    %1333 = vmatpush1.msra.mxu0 %v834
    %1334 = vmatprep.subr.mxu0 0.0
    %1335 = vmatpush1.msra.mxu0 %v835
    %1336 = vmatprep.subr.mxu0 0.0
    %1337 = vmatpush1.msra.mxu0 %v836
    %1338 = vmatprep.subr.mxu0 0.0
    %1339 = vmatpush1.msra.mxu0 %v837
    %1340 = vmatprep.subr.mxu0 0.0
    %1341 = vmatpush1.msra.mxu0 %v838
    %1342 = vmatprep.subr.mxu0 0.0
    %1343 = vmatpush1.msra.mxu0 %v839
    %1344 = vmatprep.subr.mxu0 0.0
    %1345 = vmatpush1.msra.mxu0 %v840
    %1346 = vmatprep.subr.mxu0 0.0
    %1347 = vmatpush1.msra.mxu0 %v841
    %1348 = vmatprep.subr.mxu0 0.0
    %1349 = vmatpush1.msra.mxu0 %v842
    %1350 = vmatprep.subr.mxu0 0.0
    %1351 = vmatpush1.msra.mxu0 %v843
    %1352 = vmatprep.subr.mxu0 0.0
    %1353 = vmatpush1.msra.mxu0 %v844
    %1354 = vmatprep.subr.mxu0 0.0
    %1355 = vmatpush1.msra.mxu0 %v845
    %1356 = vmatprep.subr.mxu0 0.0
    %1357 = vmatpush1.msra.mxu0 %v846
    %1358 = vmatprep.subr.mxu0 0.0
    %1359 = vmatpush1.msra.mxu0 %v847
    %1360 = vmatprep.mubr.f32.mxu0 %v993
    %1361 = vmatmul.mubr.f32.gmra.mrb[0].mxu0 %v992
    %v1362 = vpop.f32.mrb[0].mxu0
    %v1363 = vadd.f32 %v1293, %v1362
    %v1364 = vpop.f32.mrb[0].mxu0
    %1365 = vdwg.mxu0
    %1366 = vmatprep.subr.mxu0 0.0
    %1367 = vmatpush1.msra.mxu0 %v848
    %1368 = vmatprep.subr.mxu0 0.0
    %1369 = vmatpush1.msra.mxu0 %v849
    %1370 = vmatprep.subr.mxu0 0.0
    %1371 = vmatpush1.msra.mxu0 %v850
    %1372 = vmatprep.subr.mxu0 0.0
    %1373 = vmatpush1.msra.mxu0 %v851
    %1374 = vmatprep.subr.mxu0 0.0
    %1375 = vmatpush1.msra.mxu0 %v852
    %1376 = vmatprep.subr.mxu0 0.0
    %1377 = vmatpush1.msra.mxu0 %v853
    %1378 = vmatprep.subr.mxu0 0.0
    %1379 = vmatpush1.msra.mxu0 %v854
    %1380 = vmatprep.subr.mxu0 0.0
    %1381 = vmatpush1.msra.mxu0 %v855
    %1382 = vmatprep.subr.mxu0 0.0
    %1383 = vmatpush1.msra.mxu0 %v856
    %1384 = vmatprep.subr.mxu0 0.0
    %1385 = vmatpush1.msra.mxu0 %v857
    %1386 = vmatprep.subr.mxu0 0.0
    %1387 = vmatpush1.msra.mxu0 %v858
    %1388 = vmatprep.subr.mxu0 0.0
    %1389 = vmatpush1.msra.mxu0 %v859
    %1390 = vmatprep.subr.mxu0 0.0
    %1391 = vmatpush1.msra.mxu0 %v860
    %1392 = vmatprep.subr.mxu0 0.0
    %1393 = vmatpush1.msra.mxu0 %v861
    %1394 = vmatprep.subr.mxu0 0.0
    %1395 = vmatpush1.msra.mxu0 %v862
    %1396 = vmatprep.subr.mxu0 0.0
    %1397 = vmatpush1.msra.mxu0 %v863
    %1398 = vmatprep.subr.mxu0 0.0
    %1399 = vmatpush1.msra.mxu0 %v864
    %1400 = vmatprep.subr.mxu0 0.0
    %1401 = vmatpush1.msra.mxu0 %v865
    %1402 = vmatprep.subr.mxu0 0.0
    %1403 = vmatpush1.msra.mxu0 %v866
    %1404 = vmatprep.subr.mxu0 0.0
    %1405 = vmatpush1.msra.mxu0 %v867
    %1406 = vmatprep.subr.mxu0 0.0
    %1407 = vmatpush1.msra.mxu0 %v868
    %1408 = vmatprep.subr.mxu0 0.0
    %1409 = vmatpush1.msra.mxu0 %v869
    %1410 = vmatprep.subr.mxu0 0.0
    %1411 = vmatpush1.msra.mxu0 %v870
    %1412 = vmatprep.subr.mxu0 0.0
    %1413 = vmatpush1.msra.mxu0 %v871
    %1414 = vmatprep.subr.mxu0 0.0
    %1415 = vmatpush1.msra.mxu0 %v872
    %1416 = vmatprep.subr.mxu0 0.0
    %1417 = vmatpush1.msra.mxu0 %v873
    %1418 = vmatprep.subr.mxu0 0.0
    %1419 = vmatpush1.msra.mxu0 %v874
    %1420 = vmatprep.subr.mxu0 0.0
    %1421 = vmatpush1.msra.mxu0 %v875
    %1422 = vmatprep.subr.mxu0 0.0
    %1423 = vmatpush1.msra.mxu0 %v876
    %1424 = vmatprep.subr.mxu0 0.0
    %1425 = vmatpush1.msra.mxu0 %v877
    %1426 = vmatprep.subr.mxu0 0.0
    %1427 = vmatpush1.msra.mxu0 %v878
    %1428 = vmatprep.subr.mxu0 0.0
    %1429 = vmatpush1.msra.mxu0 %v879
    %1430 = vmatprep.mubr.f32.mxu0 %v995
    %1431 = vmatmul.mubr.f32.gmra.mrb[0].mxu0 %v994
    %v1432 = vpop.f32.mrb[0].mxu0
    %v1433 = vadd.f32 %v1363, %v1432
    %v1434 = vpop.f32.mrb[0].mxu0
    %1435 = vdwg.mxu0
    %1436 = vmatprep.subr.mxu0 0.0
    %1437 = vmatpush1.msra.mxu0 %v880
    %1438 = vmatprep.subr.mxu0 0.0
    %1439 = vmatpush1.msra.mxu0 %v881
    %1440 = vmatprep.subr.mxu0 0.0
    %1441 = vmatpush1.msra.mxu0 %v882
    %1442 = vmatprep.subr.mxu0 0.0
    %1443 = vmatpush1.msra.mxu0 %v883
    %1444 = vmatprep.subr.mxu0 0.0
    %1445 = vmatpush1.msra.mxu0 %v884
    %1446 = vmatprep.subr.mxu0 0.0
    %1447 = vmatpush1.msra.mxu0 %v885
    %1448 = vmatprep.subr.mxu0 0.0
    %1449 = vmatpush1.msra.mxu0 %v886
    %1450 = vmatprep.subr.mxu0 0.0
    %1451 = vmatpush1.msra.mxu0 %v887
    %1452 = vmatprep.subr.mxu0 0.0
    %1453 = vmatpush1.msra.mxu0 %v888
    %1454 = vmatprep.subr.mxu0 0.0
    %1455 = vmatpush1.msra.mxu0 %v889
    %1456 = vmatprep.subr.mxu0 0.0
    %1457 = vmatpush1.msra.mxu0 %v890
    %1458 = vmatprep.subr.mxu0 0.0
    %1459 = vmatpush1.msra.mxu0 %v891
    %1460 = vmatprep.subr.mxu0 0.0
    %1461 = vmatpush1.msra.mxu0 %v892
    %1462 = vmatprep.subr.mxu0 0.0
    %1463 = vmatpush1.msra.mxu0 %v893
    %1464 = vmatprep.subr.mxu0 0.0
    %1465 = vmatpush1.msra.mxu0 %v894
    %1466 = vmatprep.subr.mxu0 0.0
    %1467 = vmatpush1.msra.mxu0 %v895
    %1468 = vmatprep.subr.mxu0 0.0
    %1469 = vmatpush1.msra.mxu0 %v896
    %1470 = vmatprep.subr.mxu0 0.0
    %1471 = vmatpush1.msra.mxu0 %v897
    %1472 = vmatprep.subr.mxu0 0.0
    %1473 = vmatpush1.msra.mxu0 %v898
    %1474 = vmatprep.subr.mxu0 0.0
    %1475 = vmatpush1.msra.mxu0 %v899
    %1476 = vmatprep.subr.mxu0 0.0
    %1477 = vmatpush1.msra.mxu0 %v900
    %1478 = vmatprep.subr.mxu0 0.0
    %1479 = vmatpush1.msra.mxu0 %v901
    %1480 = vmatprep.subr.mxu0 0.0
    %1481 = vmatpush1.msra.mxu0 %v902
    %1482 = vmatprep.subr.mxu0 0.0
    %1483 = vmatpush1.msra.mxu0 %v903
    %1484 = vmatprep.subr.mxu0 0.0
    %1485 = vmatpush1.msra.mxu0 %v904
    %1486 = vmatprep.subr.mxu0 0.0
    %1487 = vmatpush1.msra.mxu0 %v905
    %1488 = vmatprep.subr.mxu0 0.0
    %1489 = vmatpush1.msra.mxu0 %v906
    %1490 = vmatprep.subr.mxu0 0.0
    %1491 = vmatpush1.msra.mxu0 %v907
    %1492 = vmatprep.subr.mxu0 0.0
    %1493 = vmatpush1.msra.mxu0 %v908
    %1494 = vmatprep.subr.mxu0 0.0
    %1495 = vmatpush1.msra.mxu0 %v909
    %1496 = vmatprep.subr.mxu0 0.0
    %1497 = vmatpush1.msra.mxu0 %v910
    %1498 = vmatprep.subr.mxu0 0.0
    %1499 = vmatpush1.msra.mxu0 %v911
    %1500 = vmatprep.mubr.f32.mxu0 %v997
    %1501 = vmatmul.mubr.f32.gmra.mrb[0].mxu0 %v996
    %v1502 = vpop.f32.mrb[0].mxu0
    %v1503 = vadd.f32 %v1433, %v1502
    %v1504 = vpop.f32.mrb[0].mxu0
    %1505 = vdwg.mxu0
    %1506 = vmatprep.subr.mxu0 0.0
    %1507 = vmatpush1.msra.mxu0 %v912
    %1508 = vmatprep.subr.mxu0 0.0
    %1509 = vmatpush1.msra.mxu0 %v913
    %1510 = vmatprep.subr.mxu0 0.0
    %1511 = vmatpush1.msra.mxu0 %v914
    %1512 = vmatprep.subr.mxu0 0.0
    %1513 = vmatpush1.msra.mxu0 %v915
    %1514 = vmatprep.subr.mxu0 0.0
    %1515 = vmatpush1.msra.mxu0 %v916
    %1516 = vmatprep.subr.mxu0 0.0
    %1517 = vmatpush1.msra.mxu0 %v917
    %1518 = vmatprep.subr.mxu0 0.0
    %1519 = vmatpush1.msra.mxu0 %v918
    %1520 = vmatprep.subr.mxu0 0.0
    %1521 = vmatpush1.msra.mxu0 %v919
    %1522 = vmatprep.subr.mxu0 0.0
    %1523 = vmatpush1.msra.mxu0 %v920
    %1524 = vmatprep.subr.mxu0 0.0
    %1525 = vmatpush1.msra.mxu0 %v921
    %1526 = vmatprep.subr.mxu0 0.0
    %1527 = vmatpush1.msra.mxu0 %v922
    %1528 = vmatprep.subr.mxu0 0.0
    %1529 = vmatpush1.msra.mxu0 %v923
    %1530 = vmatprep.subr.mxu0 0.0
    %1531 = vmatpush1.msra.mxu0 %v924
    %1532 = vmatprep.subr.mxu0 0.0
    %1533 = vmatpush1.msra.mxu0 %v925
    %1534 = vmatprep.subr.mxu0 0.0
    %1535 = vmatpush1.msra.mxu0 %v926
    %1536 = vmatprep.subr.mxu0 0.0
    %1537 = vmatpush1.msra.mxu0 %v927
    %1538 = vmatprep.subr.mxu0 0.0
    %1539 = vmatpush1.msra.mxu0 %v928
    %1540 = vmatprep.subr.mxu0 0.0
    %1541 = vmatpush1.msra.mxu0 %v929
    %1542 = vmatprep.subr.mxu0 0.0
    %1543 = vmatpush1.msra.mxu0 %v930
    %1544 = vmatprep.subr.mxu0 0.0
    %1545 = vmatpush1.msra.mxu0 %v931
    %1546 = vmatprep.subr.mxu0 0.0
    %1547 = vmatpush1.msra.mxu0 %v932
    %1548 = vmatprep.subr.mxu0 0.0
    %1549 = vmatpush1.msra.mxu0 %v933
    %1550 = vmatprep.subr.mxu0 0.0
    %1551 = vmatpush1.msra.mxu0 %v934
    %1552 = vmatprep.subr.mxu0 0.0
    %1553 = vmatpush1.msra.mxu0 %v935
    %1554 = vmatprep.subr.mxu0 0.0
    %1555 = vmatpush1.msra.mxu0 %v936
    %1556 = vmatprep.subr.mxu0 0.0
    %1557 = vmatpush1.msra.mxu0 %v937
    %1558 = vmatprep.subr.mxu0 0.0
    %1559 = vmatpush1.msra.mxu0 %v938
    %1560 = vmatprep.subr.mxu0 0.0
    %1561 = vmatpush1.msra.mxu0 %v939
    %1562 = vmatprep.subr.mxu0 0.0
    %1563 = vmatpush1.msra.mxu0 %v940
    %1564 = vmatprep.subr.mxu0 0.0
    %1565 = vmatpush1.msra.mxu0 %v941
    %1566 = vmatprep.subr.mxu0 0.0
    %1567 = vmatpush1.msra.mxu0 %v942
    %1568 = vmatprep.subr.mxu0 0.0
    %1569 = vmatpush1.msra.mxu0 %v943
    %1570 = vmatprep.mubr.f32.mxu0 %v999
    %1571 = vmatmul.mubr.f32.gmra.mrb[0].mxu0 %v998
    %v1572 = vpop.f32.mrb[0].mxu0
    %v1573 = vadd.f32 %v1503, %v1572
    %v1574 = vpop.f32.mrb[0].mxu0
    %1575 = vdwg.mxu0
    %1576 = vst [vmem:[#allocation2] sm:$0x3] %v1573
    // Predicated region
    $region14: #{tpu_custom_call.1} parent=1 // pred_check
      _
    $region15: #{tpu_custom_call.1} parent=1 // pred_check_branch
      %1578 = sbr.rel (0) target = $region17
    $region16: #{tpu_custom_call.1} parent=1 // pred_region
      %s1580 = ssub.s32 32, 32
      %1581 = vsyncadd [#allocation3], %s1580
      %s1583 = sshll.u32 [#allocation2], 4
      %s1584 = int_to_ptr.vmem [resolvable:$true] %s1583
      %1586 = dma.vmem_to_hbm [thread:$0]  %s1584, 32, %s3, [#allocation3]
    $region17: #{tpu_custom_call.1} parent=1 // pred_fallthru
      _
    // Predicated region
    $region18: #{tpu_custom_call.1} parent=1 // pred_check
      _
    $region19: #{tpu_custom_call.1} parent=1 // pred_check_branch
      %1588 = sbr.rel (0) target = $region21
    $region20: #{tpu_custom_call.1} parent=1 // pred_region
      %1589 = dma.done [#allocation3], 32
    $region21: #{tpu_custom_call.1} parent=1 // pred_fallthru
      _
    %1590 = vsyncpa [#allocation3], 1

</llo_original>
